<compile_context>
chip_gen: v7x
topology: tpu7x:2x2x1
jax: 0.10.0
libtpu: 0.0.40
codegen_flags: <defaults>
</compile_context>

<pallas_src>
import math

import jax
import jax.numpy as jnp
from jax.experimental import pallas as pl
from jax.experimental.pallas import tpu as pltpu

NODES = 7
D_IN = 7
D_H1 = 7 * 6 * 2            # 84
D_H2 = NODES * 6 * 8        # 336
D_H3 = NODES * 6 * 4 * 8    # 1344
D_OUT = 1

# f32-slab row layout (lane width = D_H3 = 1344).
ROW_B3 = 0                  # lanes [0:1344]
ROW_W4 = 1                  # lanes [0:1344]   (output weight, lane-major)
ROW_B2 = 2                  # lanes [0:336]
ROW_B1 = 3                  # lanes [0:84]
ROW_W1 = 4                  # rows 4..10, lanes [0:84]  (w1[k, :])
SLAB_ROWS = ROW_W1 + D_IN   # 11

INV_SQRT2 = 1.0 / math.sqrt(2.0)


def _gelu_exact(x):
    # F.gelu default in PyTorch is the exact erf formulation.
    return 0.5 * x * (1.0 + jax.lax.erf(x * INV_SQRT2))


def _mlp_kernel(sc_ref, slab_ref, w2_ref, w3_ref, o_ref):
    # ---- Layer 1 (7 -> 84): 7 scalar-broadcast FMAs on the VPU (no MXU) ----
    h = slab_ref[ROW_B1:ROW_B1 + 1, 0:D_H1]                       # b1, (1, 84)
    for k in range(D_IN):                                         # static unroll
        h = h + sc_ref[k] * slab_ref[ROW_W1 + k:ROW_W1 + k + 1, 0:D_H1]
    h = _gelu_exact(h)                                            # (1, 84) f32

    # ---- Layer 2 (84 -> 336): bf16 weights, f32 MXU accumulation ----
    h = jnp.dot(h.astype(w2_ref.dtype), w2_ref[...],
                preferred_element_type=jnp.float32)
    h = _gelu_exact(h + slab_ref[ROW_B2:ROW_B2 + 1, 0:D_H2])      # (1, 336) f32

    # ---- Layer 3 (336 -> 1344): bf16 weights, f32 MXU accumulation ----
    h = jnp.dot(h.astype(w3_ref.dtype), w3_ref[...],
                preferred_element_type=jnp.float32)
    h = _gelu_exact(h + slab_ref[ROW_B3:ROW_B3 + 1, :])           # (1, 1344) f32

    # ---- Layer 4 (1344 -> 1): lane-major weight, VPU multiply + lane reduce ----
    o_ref[...] = (jnp.sum(h * slab_ref[ROW_W4:ROW_W4 + 1, :],
                          axis=-1, keepdims=True)
                  + sc_ref[D_IN])                                 # (1, 1) f32


def pack_params(params, *, bf16_weights=True):
    """Pack the 8 parameter tensors into 3 kernel operands (+ b4 scalar).

    Returns (f32_slab (11,1344), w2 (84,336) bf16, w3 (336,1344) bf16, b4 (1,)).
    bf16_weights=False keeps w2/w3 in f32 (exact PyTorch numerics, 2x the DMA).
    """
    (w1, b1), (w2, b2), (w3, b3), (w4, b4) = params
    slab = jnp.zeros((SLAB_ROWS, D_H3), jnp.float32)
    slab = slab.at[ROW_B3, :].set(b3.reshape(-1).astype(jnp.float32))
    slab = slab.at[ROW_W4, :].set(w4.reshape(-1).astype(jnp.float32))
    slab = slab.at[ROW_B2, :D_H2].set(b2.reshape(-1).astype(jnp.float32))
    slab = slab.at[ROW_B1, :D_H1].set(b1.reshape(-1).astype(jnp.float32))
    slab = slab.at[ROW_W1:ROW_W1 + D_IN, :D_H1].set(w1.astype(jnp.float32))
    wdt = jnp.bfloat16 if bf16_weights else jnp.float32
    # TODO(synk): optional int8 per-column-scaled W3 for v5e/v6e (not portable to
    # v7x's fp8-only MXU), left disabled.
    return (slab, w2.astype(wdt), w3.astype(wdt),
            b4.reshape(-1).astype(jnp.float32))


def simplified_linear_net(x, packed):
    """x: (nodes, 1) float32. Returns (1,) float32 — same as the PyTorch module."""
    slab, w2, w3, b4 = packed
    # SMEM scalar path: [x0..x6, b4]
    scalars = jnp.concatenate([x.reshape(-1).astype(jnp.float32), b4])  # (8,)

    smem = pl.BlockSpec(memory_space=pltpu.MemorySpace.SMEM)
    vmem = pl.BlockSpec(memory_space=pltpu.MemorySpace.VMEM)

    out = pl.pallas_call(
        _mlp_kernel,
        out_shape=jax.ShapeDtypeStruct((1, D_OUT), jnp.float32),
        in_specs=[smem,   # scalars: x (7) + b4 (1)
                  vmem,   # f32 slab: b3, w4, b2, b1, w1
                  vmem,   # w2 (84, 336)  bf16
                  vmem],  # w3 (336, 1344) bf16
        out_specs=vmem,
    )(scalars, slab, w2, w3)
    return out.reshape(D_OUT)


def init_params(key):
    """Deterministic synthetic params (f32). w1..w3 are (in, out); w4 is (1, 1344)."""
    params = []
    for (din, dout) in [(D_IN, D_H1), (D_H1, D_H2), (D_H2, D_H3)]:
        key, kw, kb = jax.random.split(key, 3)
        bound = 1.0 / math.sqrt(din)        # mimics nn.Linear default init range
        w = jax.random.uniform(kw, (din, dout), jnp.float32, -bound, bound)
        b = jax.random.uniform(kb, (1, dout), jnp.float32, -bound, bound)
        params.append((w, b))
    key, kw, kb = jax.random.split(key, 3)
    bound = 1.0 / math.sqrt(D_H3)
    w4 = jax.random.uniform(kw, (1, D_H3), jnp.float32, -bound, bound)   # lane-major
    b4 = jax.random.uniform(kb, (1, D_OUT), jnp.float32, -bound, bound)
    params.append((w4, b4))
    return params


def _reference(x, params, *, bf16_weights=True):
    """Pure-JAX reference using the same bf16 weight quantization as the kernel."""
    (w1, b1), (w2, b2), (w3, b3), (w4, b4) = params
    wdt = jnp.bfloat16 if bf16_weights else jnp.float32
    h = x.reshape(1, -1).astype(jnp.float32)
    h = _gelu_exact(jnp.dot(h, w1, preferred_element_type=jnp.float32) + b1)
    h = _gelu_exact(jnp.dot(h.astype(wdt), w2.astype(wdt),
                            preferred_element_type=jnp.float32) + b2)
    h = _gelu_exact(jnp.dot(h.astype(wdt), w3.astype(wdt),
                            preferred_element_type=jnp.float32) + b3)
    out = jnp.sum(h * w4, axis=-1, keepdims=True) + b4
    return out.reshape(-1)


if __name__ == "__main__":
    key = jax.random.PRNGKey(0)
    key, kx = jax.random.split(key)
    # sample.x : (nodes, 1) with nodes = 7 so that view(-1) has length 7.
    x = jax.random.normal(kx, (NODES, 1), jnp.float32)

    params = init_params(key)
    packed = pack_params(params)        # done once; reused across calls

    out = simplified_linear_net(x, packed)
    out = jax.block_until_ready(out)

    ref = _reference(x, params)
    assert out.shape == (D_OUT,)
    assert jnp.allclose(out, ref, atol=1e-3, rtol=1e-3), (out, ref)

    print("KERNEL_OK")
</pallas_src>

<mosaic_0001>
module attributes {stable_mosaic.version = 11 : i64} {
  func.func @_mlp_kernel(%arg0: memref<8xf32, #tpu.memory_space<smem>>, %arg1: memref<11x1344xf32, #tpu.memory_space<vmem>>, %arg2: memref<84x336xbf16, #tpu.memory_space<vmem>>, %arg3: memref<336x1344xbf16, #tpu.memory_space<vmem>>, %arg4: memref<1x1xf32, #tpu.memory_space<vmem>>) attributes {dimension_semantics = [], scalar_prefetch = 0 : i64, scratch_operands = 0 : i64, tpu.core_type = #tpu.core_type<tc>} {
    %c3 = arith.constant 3 : index
    %c0 = arith.constant 0 : index
    %0 = vector.load %arg1[%c3, %c0] : memref<11x1344xf32, #tpu.memory_space<vmem>>, vector<1x84xf32>
    %c0_0 = arith.constant 0 : index
    %1 = memref.load %arg0[%c0_0] : memref<8xf32, #tpu.memory_space<smem>>
    %c4 = arith.constant 4 : index
    %c0_1 = arith.constant 0 : index
    %2 = vector.load %arg1[%c4, %c0_1] : memref<11x1344xf32, #tpu.memory_space<vmem>>, vector<1x84xf32>
    %3 = vector.broadcast %1 : f32 to vector<1x84xf32>
    %4 = arith.mulf %3, %2 : vector<1x84xf32>
    %5 = arith.addf %0, %4 : vector<1x84xf32>
    %c1 = arith.constant 1 : index
    %6 = memref.load %arg0[%c1] : memref<8xf32, #tpu.memory_space<smem>>
    %c5 = arith.constant 5 : index
    %c0_2 = arith.constant 0 : index
    %7 = vector.load %arg1[%c5, %c0_2] : memref<11x1344xf32, #tpu.memory_space<vmem>>, vector<1x84xf32>
    %8 = vector.broadcast %6 : f32 to vector<1x84xf32>
    %9 = arith.mulf %8, %7 : vector<1x84xf32>
    %10 = arith.addf %5, %9 : vector<1x84xf32>
    %c2 = arith.constant 2 : index
    %11 = memref.load %arg0[%c2] : memref<8xf32, #tpu.memory_space<smem>>
    %c6 = arith.constant 6 : index
    %c0_3 = arith.constant 0 : index
    %12 = vector.load %arg1[%c6, %c0_3] : memref<11x1344xf32, #tpu.memory_space<vmem>>, vector<1x84xf32>
    %13 = vector.broadcast %11 : f32 to vector<1x84xf32>
    %14 = arith.mulf %13, %12 : vector<1x84xf32>
    %15 = arith.addf %10, %14 : vector<1x84xf32>
    %c3_4 = arith.constant 3 : index
    %16 = memref.load %arg0[%c3_4] : memref<8xf32, #tpu.memory_space<smem>>
    %c7 = arith.constant 7 : index
    %c0_5 = arith.constant 0 : index
    %17 = vector.load %arg1[%c7, %c0_5] : memref<11x1344xf32, #tpu.memory_space<vmem>>, vector<1x84xf32>
    %18 = vector.broadcast %16 : f32 to vector<1x84xf32>
    %19 = arith.mulf %18, %17 : vector<1x84xf32>
    %20 = arith.addf %15, %19 : vector<1x84xf32>
    %c4_6 = arith.constant 4 : index
    %21 = memref.load %arg0[%c4_6] : memref<8xf32, #tpu.memory_space<smem>>
    %c8 = arith.constant 8 : index
    %c0_7 = arith.constant 0 : index
    %22 = vector.load %arg1[%c8, %c0_7] : memref<11x1344xf32, #tpu.memory_space<vmem>>, vector<1x84xf32>
    %23 = vector.broadcast %21 : f32 to vector<1x84xf32>
    %24 = arith.mulf %23, %22 : vector<1x84xf32>
    %25 = arith.addf %20, %24 : vector<1x84xf32>
    %c5_8 = arith.constant 5 : index
    %26 = memref.load %arg0[%c5_8] : memref<8xf32, #tpu.memory_space<smem>>
    %c9 = arith.constant 9 : index
    %c0_9 = arith.constant 0 : index
    %27 = vector.load %arg1[%c9, %c0_9] : memref<11x1344xf32, #tpu.memory_space<vmem>>, vector<1x84xf32>
    %28 = vector.broadcast %26 : f32 to vector<1x84xf32>
    %29 = arith.mulf %28, %27 : vector<1x84xf32>
    %30 = arith.addf %25, %29 : vector<1x84xf32>
    %c6_10 = arith.constant 6 : index
    %31 = memref.load %arg0[%c6_10] : memref<8xf32, #tpu.memory_space<smem>>
    %c10 = arith.constant 10 : index
    %c0_11 = arith.constant 0 : index
    %32 = vector.load %arg1[%c10, %c0_11] : memref<11x1344xf32, #tpu.memory_space<vmem>>, vector<1x84xf32>
    %33 = vector.broadcast %31 : f32 to vector<1x84xf32>
    %34 = arith.mulf %33, %32 : vector<1x84xf32>
    %35 = arith.addf %30, %34 : vector<1x84xf32>
    %cst = arith.constant 5.000000e-01 : f32
    %36 = vector.broadcast %cst : f32 to vector<1x84xf32>
    %37 = arith.mulf %36, %35 : vector<1x84xf32>
    %cst_12 = arith.constant 0.707106769 : f32
    %38 = vector.broadcast %cst_12 : f32 to vector<1x84xf32>
    %39 = arith.mulf %35, %38 : vector<1x84xf32>
    %40 = math.erf %39 : vector<1x84xf32>
    %cst_13 = arith.constant 1.000000e+00 : f32
    %41 = vector.broadcast %cst_13 : f32 to vector<1x84xf32>
    %42 = arith.addf %41, %40 : vector<1x84xf32>
    %43 = arith.mulf %37, %42 : vector<1x84xf32>
    %44 = arith.truncf %43 : vector<1x84xf32> to vector<1x84xbf16>
    %c0_14 = arith.constant 0 : index
    %c0_15 = arith.constant 0 : index
    %45 = vector.load %arg2[%c0_14, %c0_15] : memref<84x336xbf16, #tpu.memory_space<vmem>>, vector<84x336xbf16>
    %cst_16 = arith.constant dense<0.000000e+00> : vector<1x336xf32>
    %46 = tpu.matmul %44, %45, %cst_16 {dimension_numbers = #tpu.dot_dimension_numbers<[1], [0], [0], [1], [0, 0, 1, 1], [], []>} : vector<1x84xbf16>, vector<84x336xbf16>, vector<1x336xf32> -> vector<1x336xf32>
    %c2_17 = arith.constant 2 : index
    %c0_18 = arith.constant 0 : index
    %47 = vector.load %arg1[%c2_17, %c0_18] : memref<11x1344xf32, #tpu.memory_space<vmem>>, vector<1x336xf32>
    %48 = arith.addf %46, %47 : vector<1x336xf32>
    %cst_19 = arith.constant 5.000000e-01 : f32
    %49 = vector.broadcast %cst_19 : f32 to vector<1x336xf32>
    %50 = arith.mulf %49, %48 : vector<1x336xf32>
    %cst_20 = arith.constant 0.707106769 : f32
    %51 = vector.broadcast %cst_20 : f32 to vector<1x336xf32>
    %52 = arith.mulf %48, %51 : vector<1x336xf32>
    %53 = math.erf %52 : vector<1x336xf32>
    %cst_21 = arith.constant 1.000000e+00 : f32
    %54 = vector.broadcast %cst_21 : f32 to vector<1x336xf32>
    %55 = arith.addf %54, %53 : vector<1x336xf32>
    %56 = arith.mulf %50, %55 : vector<1x336xf32>
    %57 = arith.truncf %56 : vector<1x336xf32> to vector<1x336xbf16>
    %c0_22 = arith.constant 0 : index
    %c0_23 = arith.constant 0 : index
    %58 = vector.load %arg3[%c0_22, %c0_23] : memref<336x1344xbf16, #tpu.memory_space<vmem>>, vector<336x1344xbf16>
    %cst_24 = arith.constant dense<0.000000e+00> : vector<1x1344xf32>
    %59 = tpu.matmul %57, %58, %cst_24 {dimension_numbers = #tpu.dot_dimension_numbers<[1], [0], [0], [1], [0, 0, 1, 1], [], []>} : vector<1x336xbf16>, vector<336x1344xbf16>, vector<1x1344xf32> -> vector<1x1344xf32>
    %c0_25 = arith.constant 0 : index
    %c0_26 = arith.constant 0 : index
    %60 = vector.load %arg1[%c0_25, %c0_26] : memref<11x1344xf32, #tpu.memory_space<vmem>>, vector<1x1344xf32>
    %61 = arith.addf %59, %60 : vector<1x1344xf32>
    %cst_27 = arith.constant 5.000000e-01 : f32
    %62 = vector.broadcast %cst_27 : f32 to vector<1x1344xf32>
    %63 = arith.mulf %62, %61 : vector<1x1344xf32>
    %cst_28 = arith.constant 0.707106769 : f32
    %64 = vector.broadcast %cst_28 : f32 to vector<1x1344xf32>
    %65 = arith.mulf %61, %64 : vector<1x1344xf32>
    %66 = math.erf %65 : vector<1x1344xf32>
    %cst_29 = arith.constant 1.000000e+00 : f32
    %67 = vector.broadcast %cst_29 : f32 to vector<1x1344xf32>
    %68 = arith.addf %67, %66 : vector<1x1344xf32>
    %69 = arith.mulf %63, %68 : vector<1x1344xf32>
    %c1_30 = arith.constant 1 : index
    %c0_31 = arith.constant 0 : index
    %70 = vector.load %arg1[%c1_30, %c0_31] : memref<11x1344xf32, #tpu.memory_space<vmem>>, vector<1x1344xf32>
    %71 = arith.mulf %69, %70 : vector<1x1344xf32>
    %cst_32 = arith.constant dense<0.000000e+00> : vector<1xf32>
    %72 = vector.multi_reduction <add>, %71, %cst_32 [1] : vector<1x1344xf32> to vector<1xf32>
    %73 = vector.shape_cast %72 : vector<1xf32> to vector<1x1xf32>
    %c7_33 = arith.constant 7 : index
    %74 = memref.load %arg0[%c7_33] : memref<8xf32, #tpu.memory_space<smem>>
    %75 = vector.broadcast %74 : f32 to vector<1x1xf32>
    %76 = arith.addf %73, %75 : vector<1x1xf32>
    %c0_34 = arith.constant 0 : index
    %c0_35 = arith.constant 0 : index
    %77 = vector.load %arg4[%c0_34, %c0_35] : memref<1x1xf32, #tpu.memory_space<vmem>>, vector<1x1xf32>
    tpu.vector_store %arg4[%c0_34, %c0_35], %76 {strides = array<i32>} : memref<1x1xf32, #tpu.memory_space<vmem>>, vector<1x1xf32>,
    return
  }
}

</mosaic_0001>

<llo_original>
// kernel: tpu_custom_call.1
$region0: #{tpu_custom_call.1}
  #allocation0 [shape = 'u32[]', space=smem, size = 0x4, offset = 0x4, fixed_abs, tag = 'smem constant byte address 0x4 - core index']
  #allocation1 [shape = 'u32[144,128]{1,0:T(1,128)}', space=vmem, size = 0x12000, scoped, tag = 'internal scratch']
  %s0 = inlined_call_operand.hbm [shape: f32[8], index: 0, kind: input, shape index: {}]
  %s1 = inlined_call_operand.hbm [shape: f32[11,1344], index: 1, kind: input, shape index: {}]
  %s2 = inlined_call_operand.hbm [shape: bf16[84,336], index: 2, kind: input, shape index: {}]
  %s3 = inlined_call_operand.hbm [shape: bf16[336,1344], index: 3, kind: input, shape index: {}]
  %s4 = inlined_call_operand.hbm [shape: f32[1,1], index: 4, kind: output, shape index: {}]
  %s5 = sld [smem:[#allocation0]]
  $region42: #{tpu_custom_call.1} parent=0
    _
  %s7 = ssub.s32 1, %s5
  %s8 = scalar_select 0, %s7, %s5
  $region1: #{tpu_custom_call.1} parent=0
    #allocation2 [shape = 'u8[512]{0}', space=smem, size = 0x200, scoped, tag = 'input window, operand 0, single buffered']
    #allocation3 [shape = 's32[1]{0}', space=sflag, size = 0x4, scoped, tag = 'scoped memory for tpu_custom_call.1']
    #allocation4 [shape = 's32[1]{0}', space=sflag, size = 0x4, scoped, tag = 'scoped memory for tpu_custom_call.1']
    #allocation5 [shape = 's32[1]{0}', space=sflag, size = 0x4, scoped, tag = 'scoped memory for tpu_custom_call.1']
    #allocation6 [shape = 'u8[90112]{0}', space=vmem, size = 0x16000, scoped, tag = 'input window, operand 1, single buffered']
    #allocation7 [shape = 'u8[67584]{0}', space=vmem, size = 0x10800, scoped, tag = 'input window, operand 2, single buffered']
    #allocation8 [shape = 's32[1]{0}', space=sflag, size = 0x4, scoped, tag = 'scoped memory for tpu_custom_call.1']
    #allocation9 [shape = 'u8[946176]{0}', space=vmem, size = 0xe7000, scoped, tag = 'input window, operand 3, single buffered']
    #allocation10 [shape = 'u8[512]{0}', space=vmem, size = 0x400, scoped, tag = 'output window, operand 0, single buffered']
    %9 = vsyncpa [#allocation5], 0
    %10 = vsyncpa [#allocation3], 0
    %11 = vsyncpa [#allocation8], 0
    %12 = vsyncpa [#allocation4], 0
    // Predicated region
    $region2: #{tpu_custom_call.1} parent=1 // pred_check
      _
    $region3: #{tpu_custom_call.1} parent=1 // pred_check_branch
      %14 = sbr.rel (0) target = $region5
    $region4: #{tpu_custom_call.1} parent=1 // pred_region
      %s16 = ssub.s32 16, 16
      %17 = vsyncadd [#allocation5], %s16
      %20 = dma.hbm_to_smem %s0, 16, [#allocation2], [#allocation5]
    $region5: #{tpu_custom_call.1} parent=1 // pred_fallthru
      _
    // Predicated region
    $region6: #{tpu_custom_call.1} parent=1 // pred_check
      _
    $region7: #{tpu_custom_call.1} parent=1 // pred_check_branch
      %22 = sbr.rel (0) target = $region9
    $region8: #{tpu_custom_call.1} parent=1 // pred_region
      %s24 = ssub.s32 2816, 2816
      %25 = vsyncadd [#allocation3], %s24
      %s26 = sshll.u32 [#allocation6], 4
      %s27 = int_to_ptr.vmem [resolvable:$true] %s26
      %32 = dma.hbm_to_vmem [thread:$0]  %s1, 2816, %s27, [#allocation3], 1408, 1408, 88
    $region9: #{tpu_custom_call.1} parent=1 // pred_fallthru
      _
    // Predicated region
    $region10: #{tpu_custom_call.1} parent=1 // pred_check
      _
    $region11: #{tpu_custom_call.1} parent=1 // pred_check_branch
      %34 = sbr.rel (0) target = $region13
    $region12: #{tpu_custom_call.1} parent=1 // pred_region
      %s36 = ssub.s32 2112, 2112
      %37 = vsyncadd [#allocation8], %s36
      %s38 = sshll.u32 [#allocation7], 4
      %s39 = int_to_ptr.vmem [resolvable:$true] %s38
      %44 = dma.hbm_to_vmem [thread:$0]  %s2, 2112, %s39, [#allocation8], 192, 192, 12
    $region13: #{tpu_custom_call.1} parent=1 // pred_fallthru
      _
    // Predicated region
    $region14: #{tpu_custom_call.1} parent=1 // pred_check
      _
    $region15: #{tpu_custom_call.1} parent=1 // pred_check_branch
      %46 = sbr.rel (0) target = $region17
    $region16: #{tpu_custom_call.1} parent=1 // pred_region
      %s48 = ssub.s32 29568, 29568
      %49 = vsyncadd [#allocation8], %s48
      %s50 = sshll.u32 [#allocation9], 4
      %s51 = int_to_ptr.vmem [resolvable:$true] %s50
      %56 = dma.hbm_to_vmem [thread:$0]  %s3, 29568, %s51, [#allocation8], 704, 704, 44
    $region17: #{tpu_custom_call.1} parent=1 // pred_fallthru
      _
    // Predicated region
    $region18: #{tpu_custom_call.1} parent=1 // pred_check
      _
    $region19: #{tpu_custom_call.1} parent=1 // pred_check_branch
      %58 = sbr.rel (0) target = $region21
    $region20: #{tpu_custom_call.1} parent=1 // pred_region
      %59 = dma.done [#allocation5], 16
    $region21: #{tpu_custom_call.1} parent=1 // pred_fallthru
      _
    // Predicated region
    $region22: #{tpu_custom_call.1} parent=1 // pred_check
      _
    $region23: #{tpu_custom_call.1} parent=1 // pred_check_branch
      %61 = sbr.rel (0) target = $region25
    $region24: #{tpu_custom_call.1} parent=1 // pred_region
      %62 = dma.done [#allocation3], 2816
    $region25: #{tpu_custom_call.1} parent=1 // pred_fallthru
      _
    // Predicated region
    $region26: #{tpu_custom_call.1} parent=1 // pred_check
      _
    $region27: #{tpu_custom_call.1} parent=1 // pred_check_branch
      %64 = sbr.rel (0) target = $region29
    $region28: #{tpu_custom_call.1} parent=1 // pred_region
      %65 = dma.done [#allocation8], 2112
    $region29: #{tpu_custom_call.1} parent=1 // pred_fallthru
      _
    // Predicated region
    $region30: #{tpu_custom_call.1} parent=1 // pred_check
      _
    $region31: #{tpu_custom_call.1} parent=1 // pred_check_branch
      %67 = sbr.rel (0) target = $region33
    $region32: #{tpu_custom_call.1} parent=1 // pred_region
      %68 = dma.done [#allocation8], 29568
    $region33: #{tpu_custom_call.1} parent=1 // pred_fallthru
      _
    %69 = sfence
    %v71 = vld [vmem:[#allocation6 + $0x3] ss:$0 sm:$0xff]
    %s72 = sld [smem:[#allocation2]]
    %v73 = vld [vmem:[#allocation6 + $0x4] ss:$0 sm:$0xff]
    %v74 = vstv %s72
    %v75 = vmul.f32 %v74, %v73
    %v76 = vadd.f32 %v71, %v75
    %s77 = sld [smem:[#allocation2 + $0x1]]
    %v78 = vld [vmem:[#allocation6 + $0x5] ss:$0 sm:$0xff]
    %v79 = vstv %s77
    %v80 = vmul.f32 %v79, %v78
    %v81 = vadd.f32 %v76, %v80
    %s82 = sld [smem:[#allocation2 + $0x2]]
    %v83 = vld [vmem:[#allocation6 + $0x6] ss:$0 sm:$0xff]
    %v84 = vstv %s82
    %v85 = vmul.f32 %v84, %v83
    %v86 = vadd.f32 %v81, %v85
    %s87 = sld [smem:[#allocation2 + $0x3]]
    %v88 = vld [vmem:[#allocation6 + $0x7] ss:$0 sm:$0xff]
    %v89 = vstv %s87
    %v90 = vmul.f32 %v89, %v88
    %v91 = vadd.f32 %v86, %v90
    %s92 = sld [smem:[#allocation2 + $0x4]]
    %v93 = vld [vmem:[#allocation6 + $0x58] ss:$0 sm:$0xff]
    %v94 = vstv %s92
    %v95 = vmul.f32 %v94, %v93
    %v96 = vadd.f32 %v91, %v95
    %s97 = sld [smem:[#allocation2 + $0x5]]
    %v98 = vld [vmem:[#allocation6 + $0x59] ss:$0 sm:$0xff]
    %v99 = vstv %s97
    %v100 = vmul.f32 %v99, %v98
    %v101 = vadd.f32 %v96, %v100
    %s102 = sld [smem:[#allocation2 + $0x6]]
    %v103 = vld [vmem:[#allocation6 + $0x5a] ss:$0 sm:$0xff]
    %v104 = vstv %s102
    %v105 = vmul.f32 %v104, %v103
    %v106 = vadd.f32 %v101, %v105
    %v107 = vmul.f32 %v106, 0.5
    %v108 = vmul.f32 %v106, 0.70710677
    %v109 = verf.f32.pop %v108
    %v110 = vadd.f32 %v109, 1.0
    %v111 = vmul.f32 %v107, %v110
    %v112 = vpack.c.bf16 %v111, %v111
    %v113 = vld [vmem:[#allocation7] sm:$0xff]
    %v114 = vld [vmem:[#allocation7 + $0x8] sm:$0xf]
    %v115 = vld [vmem:[#allocation7 + $0xc] sm:$0xff]
    %v116 = vld [vmem:[#allocation7 + $0x14] sm:$0xf]
    %v117 = vld [vmem:[#allocation7 + $0x18] sm:$0xff]
    %v118 = vld [vmem:[#allocation7 + $0x20] sm:$0xf]
    %v119 = vld [vmem:[#allocation7 + $0x24] sm:$0xff]
    %v120 = vld [vmem:[#allocation7 + $0x2c] sm:$0xf]
    %v121 = vld [vmem:[#allocation7 + $0x30] sm:$0xff]
    %v122 = vld [vmem:[#allocation7 + $0x38] sm:$0xf]
    %v123 = vld [vmem:[#allocation7 + $0x3c] sm:$0xff]
    %v124 = vld [vmem:[#allocation7 + $0x44] sm:$0xf]
    %v125 = vld [vmem:[#allocation7 + $0x48] sm:$0xff]
    %v126 = vld [vmem:[#allocation7 + $0x50] sm:$0xf]
    %v127 = vld [vmem:[#allocation7 + $0x54] sm:$0xff]
    %v128 = vld [vmem:[#allocation7 + $0x5c] sm:$0xf]
    %v129 = vld [vmem:[#allocation7 + $0x60] sm:$0xff]
    %v130 = vld [vmem:[#allocation7 + $0x68] sm:$0xf]
    %v131 = vld [vmem:[#allocation7 + $0x6c] sm:$0xff]
    %v132 = vld [vmem:[#allocation7 + $0x74] sm:$0xf]
    %v133 = vld [vmem:[#allocation7 + $0x78] sm:$0x33]
    %v134 = vld [vmem:[#allocation7 + $0x80] sm:$0x3]
    %s135 = scalar_lea.vmem [#allocation6], 2
    %v136 = vld [vmem:[%s135] ss:$8 sm:$0x7]
    %v159 = vunpack.c.l.b16 %v113
    %v160 = vunpack.c.h.b16 %v113
    %v161 = vunpack.c.l.b16 %v114
    %v162 = vunpack.c.l.b16 %v115
    %v163 = vunpack.c.h.b16 %v115
    %v164 = vunpack.c.l.b16 %v116
    %v165 = vunpack.c.l.b16 %v117
    %v166 = vunpack.c.h.b16 %v117
    %v167 = vunpack.c.l.b16 %v118
    %v168 = vunpack.c.l.b16 %v119
    %v169 = vunpack.c.h.b16 %v119
    %v170 = vunpack.c.l.b16 %v120
    %v171 = vunpack.c.l.b16 %v121
    %v172 = vunpack.c.h.b16 %v121
    %v173 = vunpack.c.l.b16 %v122
    %v174 = vunpack.c.l.b16 %v123
    %v175 = vunpack.c.h.b16 %v123
    %v176 = vunpack.c.l.b16 %v124
    %v177 = vunpack.c.l.b16 %v125
    %v178 = vunpack.c.h.b16 %v125
    %v179 = vunpack.c.l.b16 %v126
    %v180 = vunpack.c.l.b16 %v127
    %v181 = vunpack.c.h.b16 %v127
    %v182 = vunpack.c.l.b16 %v128
    %v183 = vunpack.c.l.b16 %v129
    %v184 = vunpack.c.h.b16 %v129
    %v185 = vunpack.c.l.b16 %v130
    %v186 = vunpack.c.l.b16 %v131
    %v187 = vunpack.c.h.b16 %v131
    %v188 = vunpack.c.l.b16 %v132
    %v189 = vunpack.c.l.b16 %v133
    %v190 = vunpack.c.h.b16 %v133
    %v191 = vunpack.c.l.b16 %v134
    %v192 = vpack.c.b16 %v162, %v159
    %v193 = vpack.c.b16 %v163, %v160
    %v194 = vpack.c.b16 %v164, %v161
    %v195 = vpack.c.b16 %v168, %v165
    %v196 = vpack.c.b16 %v169, %v166
    %v197 = vpack.c.b16 %v170, %v167
    %v198 = vpack.c.b16 %v174, %v171
    %v199 = vpack.c.b16 %v175, %v172
    %v200 = vpack.c.b16 %v176, %v173
    %v201 = vpack.c.b16 %v180, %v177
    %v202 = vpack.c.b16 %v181, %v178
    %v203 = vpack.c.b16 %v182, %v179
    %v204 = vpack.c.b16 %v186, %v183
    %v205 = vpack.c.b16 %v187, %v184
    %v206 = vpack.c.b16 %v188, %v185
    %v207 = vpack.c.b16 %v189, %v189
    %v208 = vpack.c.b16 %v190, %v190
    %v209 = vpack.c.b16 %v191, %v191
    %v226 = vlaneseq
    %v227 = vshrl.u32 %v226, 7
    %v228 = vsub.s32 0, %v227
    %v229 = vrot.slane %v136, %v228
    %v230 = vlaneseq
    %v231 = vshrl.u32 %v230, 7
    %v232 = vsub.s32 1, %v231
    %v233 = vrot.slane %v136, %v232
    %v234 = vlaneseq
    %v235 = vshrl.u32 %v234, 7
    %v236 = vsub.s32 2, %v235
    %v237 = vrot.slane %v136, %v236
    %vm241 = vcmask 687104
    %v243 = vsel %vm241, %v112, 0
    %vm245 = vcmask 1041408
    %v247 = vsel %vm245, %v207, 0
    %v250 = vsel %vm245, %v208, 0
    %v253 = vsel %vm245, %v209, 0
    %255 = vmatprep.subr.bf16.mxu0 %v193
    %256 = vmatpush1.bf16.msra.mxu0 %v192
    %257 = vmatprep.subr.bf16.mxu0 %v196
    %258 = vmatpush1.bf16.msra.mxu0 %v195
    %259 = vmatprep.subr.bf16.mxu0 %v199
    %260 = vmatpush1.bf16.msra.mxu0 %v198
    %261 = vmatprep.subr.bf16.mxu0 %v202
    %262 = vmatpush1.bf16.msra.mxu0 %v201
    %263 = vmatprep.subr.bf16.mxu0 %v205
    %264 = vmatpush1.bf16.msra.mxu0 %v204
    %265 = vmatprep.subr.bf16.mxu0 %v250
    %266 = vmatpush1.bf16.msra.mxu0 %v247
    %267 = vmatprep.subr.bf16.mxu0 0
    %268 = vmatpush1.bf16.msra.mxu0 0
    %269 = vmatprep.subr.bf16.mxu0 0
    %270 = vmatpush1.bf16.msra.mxu0 0
    %271 = vmatprep.subr.bf16.mxu0 0
    %272 = vmatpush1.bf16.msra.mxu0 0
    %273 = vmatprep.subr.bf16.mxu0 0
    %274 = vmatpush1.bf16.msra.mxu0 0
    %275 = vmatprep.subr.bf16.mxu0 0
    %276 = vmatpush1.bf16.msra.mxu0 0
    %277 = vmatprep.subr.bf16.mxu0 0
    %278 = vmatpush1.bf16.msra.mxu0 0
    %279 = vmatprep.subr.bf16.mxu0 0
    %280 = vmatpush1.bf16.msra.mxu0 0
    %281 = vmatprep.subr.bf16.mxu0 0
    %282 = vmatpush1.bf16.msra.mxu0 0
    %283 = vmatprep.subr.bf16.mxu0 0
    %284 = vmatpush1.bf16.msra.mxu0 0
    %285 = vmatprep.subr.bf16.mxu0 0
    %286 = vmatpush1.bf16.msra.mxu0 0
    %287 = vmatprep.mubr.bf16.mxu0 0
    %288 = vmatmul.mubr.bf16.gmra.mrb[0].mxu0 %v243
    %v289 = vpop.f32.mrb[0].mxu0
    %v290 = vadd.f32 %v229, %v289
    %v291 = vpop.f32.mrb[0].mxu0
    %v292 = vadd.f32 %v233, %v291
    %v293 = vpop.f32.mrb[0].mxu0
    %v294 = vpop.f32.mrb[0].mxu0
    %295 = vdwg.mxu0
    %296 = vmatprep.subr.bf16.mxu0 0
    %297 = vmatpush1.bf16.msra.mxu0 %v194
    %298 = vmatprep.subr.bf16.mxu0 0
    %299 = vmatpush1.bf16.msra.mxu0 %v197
    %300 = vmatprep.subr.bf16.mxu0 0
    %301 = vmatpush1.bf16.msra.mxu0 %v200
    %302 = vmatprep.subr.bf16.mxu0 0
    %303 = vmatpush1.bf16.msra.mxu0 %v203
    %304 = vmatprep.subr.bf16.mxu0 0
    %305 = vmatpush1.bf16.msra.mxu0 %v206
    %306 = vmatprep.subr.bf16.mxu0 0
    %307 = vmatpush1.bf16.msra.mxu0 %v253
    %308 = vmatprep.subr.bf16.mxu0 0
    %309 = vmatpush1.bf16.msra.mxu0 0
    %310 = vmatprep.subr.bf16.mxu0 0
    %311 = vmatpush1.bf16.msra.mxu0 0
    %312 = vmatprep.subr.bf16.mxu0 0
    %313 = vmatpush1.bf16.msra.mxu0 0
    %314 = vmatprep.subr.bf16.mxu0 0
    %315 = vmatpush1.bf16.msra.mxu0 0
    %316 = vmatprep.subr.bf16.mxu0 0
    %317 = vmatpush1.bf16.msra.mxu0 0
    %318 = vmatprep.subr.bf16.mxu0 0
    %319 = vmatpush1.bf16.msra.mxu0 0
    %320 = vmatprep.subr.bf16.mxu0 0
    %321 = vmatpush1.bf16.msra.mxu0 0
    %322 = vmatprep.subr.bf16.mxu0 0
    %323 = vmatpush1.bf16.msra.mxu0 0
    %324 = vmatprep.subr.bf16.mxu0 0
    %325 = vmatpush1.bf16.msra.mxu0 0
    %326 = vmatprep.subr.bf16.mxu0 0
    %327 = vmatpush1.bf16.msra.mxu0 0
    %328 = vmatprep.mubr.bf16.mxu0 0
    %329 = vmatmul.mubr.bf16.gmra.mrb[0].mxu0 %v243
    %v330 = vpop.f32.mrb[0].mxu0
    %v331 = vadd.f32 %v237, %v330
    %v332 = vpop.f32.mrb[0].mxu0
    %v333 = vpop.f32.mrb[0].mxu0
    %v334 = vpop.f32.mrb[0].mxu0
    %335 = vdwg.mxu0
    %v336 = vmul.f32 %v290, 0.5
    %v337 = vmul.f32 %v292, 0.5
    %v338 = vmul.f32 %v331, 0.5
    %v339 = vmul.f32 %v290, 0.70710677
    %v340 = vmul.f32 %v292, 0.70710677
    %v341 = vmul.f32 %v331, 0.70710677
    %v342 = verf.f32.pop %v339
    %v343 = verf.f32.pop %v340
    %v344 = verf.f32.pop %v341
    %v345 = vadd.f32 %v342, 1.0
    %v346 = vadd.f32 %v343, 1.0
    %v347 = vadd.f32 %v344, 1.0
    %v348 = vmul.f32 %v336, %v345
    %v349 = vmul.f32 %v337, %v346
    %v350 = vmul.f32 %v338, %v347
    %v351 = vpack.c.bf16 %v348, %v348
    %v352 = vpack.c.bf16 %v349, %v349
    %v353 = vpack.c.bf16 %v350, %v350
    %v354 = vld [vmem:[#allocation9] sm:$0xff]
    %v355 = vld [vmem:[#allocation9 + $0x8] sm:$0xff]
    %v356 = vld [vmem:[#allocation9 + $0x10] sm:$0xff]
    %v357 = vld [vmem:[#allocation9 + $0x18] sm:$0xff]
    %v358 = vld [vmem:[#allocation9 + $0x20] sm:$0xff]
    %v359 = vld [vmem:[#allocation9 + $0x28] sm:$0xf]
    %v360 = vld [vmem:[#allocation9 + $0x2c] sm:$0xff]
    %v361 = vld [vmem:[#allocation9 + $0x34] sm:$0xff]
    %v362 = vld [vmem:[#allocation9 + $0x3c] sm:$0xff]
    %v363 = vld [vmem:[#allocation9 + $0x44] sm:$0xff]
    %v364 = vld [vmem:[#allocation9 + $0x4c] sm:$0xff]
    %v365 = vld [vmem:[#allocation9 + $0x54] sm:$0xf]
    %v366 = vld [vmem:[#allocation9 + $0x58] sm:$0xff]
    %v367 = vld [vmem:[#allocation9 + $0x60] sm:$0xff]
    %v368 = vld [vmem:[#allocation9 + $0x68] sm:$0xff]
    %v369 = vld [vmem:[#allocation9 + $0x70] sm:$0xff]
    %v370 = vld [vmem:[#allocation9 + $0x78] sm:$0xff]
    %v371 = vld [vmem:[#allocation9 + $0x80] sm:$0xf]
    %v372 = vld [vmem:[#allocation9 + $0x84] sm:$0xff]
    %v373 = vld [vmem:[#allocation9 + $0x8c] sm:$0xff]
    %v374 = vld [vmem:[#allocation9 + $0x94] sm:$0xff]
    %v375 = vld [vmem:[#allocation9 + $0x9c] sm:$0xff]
    %v376 = vld [vmem:[#allocation9 + $0xa4] sm:$0xff]
    %v377 = vld [vmem:[#allocation9 + $0xac] sm:$0xf]
    %v378 = vld [vmem:[#allocation9 + $0xb0] sm:$0xff]
    %v379 = vld [vmem:[#allocation9 + $0xb8] sm:$0xff]
    %v380 = vld [vmem:[#allocation9 + $0xc0] sm:$0xff]
    %v381 = vld [vmem:[#allocation9 + $0xc8] sm:$0xff]
    %v382 = vld [vmem:[#allocation9 + $0xd0] sm:$0xff]
    %v383 = vld [vmem:[#allocation9 + $0xd8] sm:$0xf]
    %v384 = vld [vmem:[#allocation9 + $0xdc] sm:$0xff]
    %v385 = vld [vmem:[#allocation9 + $0xe4] sm:$0xff]
    %v386 = vld [vmem:[#allocation9 + $0xec] sm:$0xff]
    %v387 = vld [vmem:[#allocation9 + $0xf4] sm:$0xff]
    %v388 = vld [vmem:[#allocation9 + $0xfc] sm:$0xff]
    %v389 = vld [vmem:[#allocation9 + $0x104] sm:$0xf]
    %v390 = vld [vmem:[#allocation9 + $0x108] sm:$0xff]
    %v391 = vld [vmem:[#allocation9 + $0x110] sm:$0xff]
    %v392 = vld [vmem:[#allocation9 + $0x118] sm:$0xff]
    %v393 = vld [vmem:[#allocation9 + $0x120] sm:$0xff]
    %v394 = vld [vmem:[#allocation9 + $0x128] sm:$0xff]
    %v395 = vld [vmem:[#allocation9 + $0x130] sm:$0xf]
    %v396 = vld [vmem:[#allocation9 + $0x134] sm:$0xff]
    %v397 = vld [vmem:[#allocation9 + $0x13c] sm:$0xff]
    %v398 = vld [vmem:[#allocation9 + $0x144] sm:$0xff]
    %v399 = vld [vmem:[#allocation9 + $0x14c] sm:$0xff]
    %v400 = vld [vmem:[#allocation9 + $0x154] sm:$0xff]
    %v401 = vld [vmem:[#allocation9 + $0x15c] sm:$0xf]
    %v402 = vld [vmem:[#allocation9 + $0x160] sm:$0xff]
    %v403 = vld [vmem:[#allocation9 + $0x168] sm:$0xff]
    %v404 = vld [vmem:[#allocation9 + $0x170] sm:$0xff]
    %v405 = vld [vmem:[#allocation9 + $0x178] sm:$0xff]
    %v406 = vld [vmem:[#allocation9 + $0x180] sm:$0xff]
    %v407 = vld [vmem:[#allocation9 + $0x188] sm:$0xf]
    %v408 = vld [vmem:[#allocation9 + $0x18c] sm:$0xff]
    %v409 = vld [vmem:[#allocation9 + $0x194] sm:$0xff]
    %v410 = vld [vmem:[#allocation9 + $0x19c] sm:$0xff]
    %v411 = vld [vmem:[#allocation9 + $0x1a4] sm:$0xff]
    %v412 = vld [vmem:[#allocation9 + $0x1ac] sm:$0xff]
    %v413 = vld [vmem:[#allocation9 + $0x1b4] sm:$0xf]
    %v414 = vld [vmem:[#allocation9 + $0x1b8] sm:$0xff]
    %v415 = vld [vmem:[#allocation9 + $0x1c0] sm:$0xff]
    %v416 = vld [vmem:[#allocation9 + $0x1c8] sm:$0xff]
    %v417 = vld [vmem:[#allocation9 + $0x1d0] sm:$0xff]
    %v418 = vld [vmem:[#allocation9 + $0x1d8] sm:$0xff]
    %v419 = vld [vmem:[#allocation9 + $0x1e0] sm:$0xf]
    %v420 = vld [vmem:[#allocation9 + $0x1e4] sm:$0xff]
    %v421 = vld [vmem:[#allocation9 + $0x1ec] sm:$0xff]
    %v422 = vld [vmem:[#allocation9 + $0x1f4] sm:$0xff]
    %v423 = vld [vmem:[#allocation9 + $0x1fc] sm:$0xff]
    %v424 = vld [vmem:[#allocation9 + $0x204] sm:$0xff]
    %v425 = vld [vmem:[#allocation9 + $0x20c] sm:$0xf]
    %v426 = vld [vmem:[#allocation9 + $0x210] sm:$0xff]
    %v427 = vld [vmem:[#allocation9 + $0x218] sm:$0xff]
    %v428 = vld [vmem:[#allocation9 + $0x220] sm:$0xff]
    %v429 = vld [vmem:[#allocation9 + $0x228] sm:$0xff]
    %v430 = vld [vmem:[#allocation9 + $0x230] sm:$0xff]
    %v431 = vld [vmem:[#allocation9 + $0x238] sm:$0xf]
    %v432 = vld [vmem:[#allocation9 + $0x23c] sm:$0xff]
    %v433 = vld [vmem:[#allocation9 + $0x244] sm:$0xff]
    %v434 = vld [vmem:[#allocation9 + $0x24c] sm:$0xff]
    %v435 = vld [vmem:[#allocation9 + $0x254] sm:$0xff]
    %v436 = vld [vmem:[#allocation9 + $0x25c] sm:$0xff]
    %v437 = vld [vmem:[#allocation9 + $0x264] sm:$0xf]
    %v438 = vld [vmem:[#allocation9 + $0x268] sm:$0xff]
    %v439 = vld [vmem:[#allocation9 + $0x270] sm:$0xff]
    %v440 = vld [vmem:[#allocation9 + $0x278] sm:$0xff]
    %v441 = vld [vmem:[#allocation9 + $0x280] sm:$0xff]
    %v442 = vld [vmem:[#allocation9 + $0x288] sm:$0xff]
    %v443 = vld [vmem:[#allocation9 + $0x290] sm:$0xf]
    %v444 = vld [vmem:[#allocation9 + $0x294] sm:$0xff]
    %v445 = vld [vmem:[#allocation9 + $0x29c] sm:$0xff]
    %v446 = vld [vmem:[#allocation9 + $0x2a4] sm:$0xff]
    %v447 = vld [vmem:[#allocation9 + $0x2ac] sm:$0xff]
    %v448 = vld [vmem:[#allocation9 + $0x2b4] sm:$0xff]
    %v449 = vld [vmem:[#allocation9 + $0x2bc] sm:$0xf]
    %v450 = vld [vmem:[#allocation9 + $0x2c0] sm:$0xff]
    %v451 = vld [vmem:[#allocation9 + $0x2c8] sm:$0xff]
    %v452 = vld [vmem:[#allocation9 + $0x2d0] sm:$0xff]
    %v453 = vld [vmem:[#allocation9 + $0x2d8] sm:$0xff]
    %v454 = vld [vmem:[#allocation9 + $0x2e0] sm:$0xff]
    %v455 = vld [vmem:[#allocation9 + $0x2e8] sm:$0xf]
    %v456 = vld [vmem:[#allocation9 + $0x2ec] sm:$0xff]
    %v457 = vld [vmem:[#allocation9 + $0x2f4] sm:$0xff]
    %v458 = vld [vmem:[#allocation9 + $0x2fc] sm:$0xff]
    %v459 = vld [vmem:[#allocation9 + $0x304] sm:$0xff]
    %v460 = vld [vmem:[#allocation9 + $0x30c] sm:$0xff]
    %v461 = vld [vmem:[#allocation9 + $0x314] sm:$0xf]
    %v462 = vld [vmem:[#allocation9 + $0x318] sm:$0xff]
    %v463 = vld [vmem:[#allocation9 + $0x320] sm:$0xff]
    %v464 = vld [vmem:[#allocation9 + $0x328] sm:$0xff]
    %v465 = vld [vmem:[#allocation9 + $0x330] sm:$0xff]
    %v466 = vld [vmem:[#allocation9 + $0x338] sm:$0xff]
    %v467 = vld [vmem:[#allocation9 + $0x340] sm:$0xf]
    %v468 = vld [vmem:[#allocation9 + $0x344] sm:$0xff]
    %v469 = vld [vmem:[#allocation9 + $0x34c] sm:$0xff]
    %v470 = vld [vmem:[#allocation9 + $0x354] sm:$0xff]
    %v471 = vld [vmem:[#allocation9 + $0x35c] sm:$0xff]
    %v472 = vld [vmem:[#allocation9 + $0x364] sm:$0xff]
    %v473 = vld [vmem:[#allocation9 + $0x36c] sm:$0xf]
    %v474 = vld [vmem:[#allocation9 + $0x370] sm:$0xff]
    %v475 = vld [vmem:[#allocation9 + $0x378] sm:$0xff]
    %v476 = vld [vmem:[#allocation9 + $0x380] sm:$0xff]
    %v477 = vld [vmem:[#allocation9 + $0x388] sm:$0xff]
    %v478 = vld [vmem:[#allocation9 + $0x390] sm:$0xff]
    %v479 = vld [vmem:[#allocation9 + $0x398] sm:$0xf]
    %v480 = vld [vmem:[#allocation9 + $0x39c] sm:$0xff]
    %v481 = vld [vmem:[#allocation9 + $0x3a4] sm:$0xff]
    %v482 = vld [vmem:[#allocation9 + $0x3ac] sm:$0xff]
    %v483 = vld [vmem:[#allocation9 + $0x3b4] sm:$0xff]
    %v484 = vld [vmem:[#allocation9 + $0x3bc] sm:$0xff]
    %v485 = vld [vmem:[#allocation9 + $0x3c4] sm:$0xf]
    %v486 = vld [vmem:[#allocation9 + $0x3c8] sm:$0xff]
    %v487 = vld [vmem:[#allocation9 + $0x3d0] sm:$0xff]
    %v488 = vld [vmem:[#allocation9 + $0x3d8] sm:$0xff]
    %v489 = vld [vmem:[#allocation9 + $0x3e0] sm:$0xff]
    %v490 = vld [vmem:[#allocation9 + $0x3e8] sm:$0xff]
    %v491 = vld [vmem:[#allocation9 + $0x3f0] sm:$0xf]
    %v492 = vld [vmem:[#allocation9 + $0x3f4] sm:$0xff]
    %v493 = vld [vmem:[#allocation9 + $0x3fc] sm:$0xff]
    %v494 = vld [vmem:[#allocation9 + $0x404] sm:$0xff]
    %v495 = vld [vmem:[#allocation9 + $0x40c] sm:$0xff]
    %v496 = vld [vmem:[#allocation9 + $0x414] sm:$0xff]
    %v497 = vld [vmem:[#allocation9 + $0x41c] sm:$0xf]
    %v498 = vld [vmem:[#allocation9 + $0x420] sm:$0xff]
    %v499 = vld [vmem:[#allocation9 + $0x428] sm:$0xff]
    %v500 = vld [vmem:[#allocation9 + $0x430] sm:$0xff]
    %v501 = vld [vmem:[#allocation9 + $0x438] sm:$0xff]
    %v502 = vld [vmem:[#allocation9 + $0x440] sm:$0xff]
    %v503 = vld [vmem:[#allocation9 + $0x448] sm:$0xf]
    %v504 = vld [vmem:[#allocation9 + $0x44c] sm:$0xff]
    %v505 = vld [vmem:[#allocation9 + $0x454] sm:$0xff]
    %v506 = vld [vmem:[#allocation9 + $0x45c] sm:$0xff]
    %v507 = vld [vmem:[#allocation9 + $0x464] sm:$0xff]
    %v508 = vld [vmem:[#allocation9 + $0x46c] sm:$0xff]
    %v509 = vld [vmem:[#allocation9 + $0x474] sm:$0xf]
    %v510 = vld [vmem:[#allocation9 + $0x478] sm:$0xff]
    %v511 = vld [vmem:[#allocation9 + $0x480] sm:$0xff]
    %v512 = vld [vmem:[#allocation9 + $0x488] sm:$0xff]
    %v513 = vld [vmem:[#allocation9 + $0x490] sm:$0xff]
    %v514 = vld [vmem:[#allocation9 + $0x498] sm:$0xff]
    %v515 = vld [vmem:[#allocation9 + $0x4a0] sm:$0xf]
    %v516 = vld [vmem:[#allocation9 + $0x4a4] sm:$0xff]
    %v517 = vld [vmem:[#allocation9 + $0x4ac] sm:$0xff]
    %v518 = vld [vmem:[#allocation9 + $0x4b4] sm:$0xff]
    %v519 = vld [vmem:[#allocation9 + $0x4bc] sm:$0xff]
    %v520 = vld [vmem:[#allocation9 + $0x4c4] sm:$0xff]
    %v521 = vld [vmem:[#allocation9 + $0x4cc] sm:$0xf]
    %v522 = vld [vmem:[#allocation9 + $0x4d0] sm:$0xff]
    %v523 = vld [vmem:[#allocation9 + $0x4d8] sm:$0xff]
    %v524 = vld [vmem:[#allocation9 + $0x4e0] sm:$0xff]
    %v525 = vld [vmem:[#allocation9 + $0x4e8] sm:$0xff]
    %v526 = vld [vmem:[#allocation9 + $0x4f0] sm:$0xff]
    %v527 = vld [vmem:[#allocation9 + $0x4f8] sm:$0xf]
    %v528 = vld [vmem:[#allocation9 + $0x4fc] sm:$0xff]
    %v529 = vld [vmem:[#allocation9 + $0x504] sm:$0xff]
    %v530 = vld [vmem:[#allocation9 + $0x50c] sm:$0xff]
    %v531 = vld [vmem:[#allocation9 + $0x514] sm:$0xff]
    %v532 = vld [vmem:[#allocation9 + $0x51c] sm:$0xff]
    %v533 = vld [vmem:[#allocation9 + $0x524] sm:$0xf]
    %v534 = vld [vmem:[#allocation9 + $0x528] sm:$0xff]
    %v535 = vld [vmem:[#allocation9 + $0x530] sm:$0xff]
    %v536 = vld [vmem:[#allocation9 + $0x538] sm:$0xff]
    %v537 = vld [vmem:[#allocation9 + $0x540] sm:$0xff]
    %v538 = vld [vmem:[#allocation9 + $0x548] sm:$0xff]
    %v539 = vld [vmem:[#allocation9 + $0x550] sm:$0xf]
    %v540 = vld [vmem:[#allocation9 + $0x554] sm:$0xff]
    %v541 = vld [vmem:[#allocation9 + $0x55c] sm:$0xff]
    %v542 = vld [vmem:[#allocation9 + $0x564] sm:$0xff]
    %v543 = vld [vmem:[#allocation9 + $0x56c] sm:$0xff]
    %v544 = vld [vmem:[#allocation9 + $0x574] sm:$0xff]
    %v545 = vld [vmem:[#allocation9 + $0x57c] sm:$0xf]
    %v546 = vld [vmem:[#allocation9 + $0x580] sm:$0xff]
    %v547 = vld [vmem:[#allocation9 + $0x588] sm:$0xff]
    %v548 = vld [vmem:[#allocation9 + $0x590] sm:$0xff]
    %v549 = vld [vmem:[#allocation9 + $0x598] sm:$0xff]
    %v550 = vld [vmem:[#allocation9 + $0x5a0] sm:$0xff]
    %v551 = vld [vmem:[#allocation9 + $0x5a8] sm:$0xf]
    %v552 = vld [vmem:[#allocation9 + $0x5ac] sm:$0xff]
    %v553 = vld [vmem:[#allocation9 + $0x5b4] sm:$0xff]
    %v554 = vld [vmem:[#allocation9 + $0x5bc] sm:$0xff]
    %v555 = vld [vmem:[#allocation9 + $0x5c4] sm:$0xff]
    %v556 = vld [vmem:[#allocation9 + $0x5cc] sm:$0xff]
    %v557 = vld [vmem:[#allocation9 + $0x5d4] sm:$0xf]
    %v558 = vld [vmem:[#allocation9 + $0x5d8] sm:$0xff]
    %v559 = vld [vmem:[#allocation9 + $0x5e0] sm:$0xff]
    %v560 = vld [vmem:[#allocation9 + $0x5e8] sm:$0xff]
    %v561 = vld [vmem:[#allocation9 + $0x5f0] sm:$0xff]
    %v562 = vld [vmem:[#allocation9 + $0x5f8] sm:$0xff]
    %v563 = vld [vmem:[#allocation9 + $0x600] sm:$0xf]
    %v564 = vld [vmem:[#allocation9 + $0x604] sm:$0xff]
    %v565 = vld [vmem:[#allocation9 + $0x60c] sm:$0xff]
    %v566 = vld [vmem:[#allocation9 + $0x614] sm:$0xff]
    %v567 = vld [vmem:[#allocation9 + $0x61c] sm:$0xff]
    %v568 = vld [vmem:[#allocation9 + $0x624] sm:$0xff]
    %v569 = vld [vmem:[#allocation9 + $0x62c] sm:$0xf]
    %v570 = vld [vmem:[#allocation9 + $0x630] sm:$0xff]
    %v571 = vld [vmem:[#allocation9 + $0x638] sm:$0xff]
    %v572 = vld [vmem:[#allocation9 + $0x640] sm:$0xff]
    %v573 = vld [vmem:[#allocation9 + $0x648] sm:$0xff]
    %v574 = vld [vmem:[#allocation9 + $0x650] sm:$0xff]
    %v575 = vld [vmem:[#allocation9 + $0x658] sm:$0xf]
    %v576 = vld [vmem:[#allocation9 + $0x65c] sm:$0xff]
    %v577 = vld [vmem:[#allocation9 + $0x664] sm:$0xff]
    %v578 = vld [vmem:[#allocation9 + $0x66c] sm:$0xff]
    %v579 = vld [vmem:[#allocation9 + $0x674] sm:$0xff]
    %v580 = vld [vmem:[#allocation9 + $0x67c] sm:$0xff]
    %v581 = vld [vmem:[#allocation9 + $0x684] sm:$0xf]
    %v582 = vld [vmem:[#allocation9 + $0x688] sm:$0xff]
    %v583 = vld [vmem:[#allocation9 + $0x690] sm:$0xff]
    %v584 = vld [vmem:[#allocation9 + $0x698] sm:$0xff]
    %v585 = vld [vmem:[#allocation9 + $0x6a0] sm:$0xff]
    %v586 = vld [vmem:[#allocation9 + $0x6a8] sm:$0xff]
    %v587 = vld [vmem:[#allocation9 + $0x6b0] sm:$0xf]
    %v588 = vld [vmem:[#allocation9 + $0x6b4] sm:$0xff]
    %v589 = vld [vmem:[#allocation9 + $0x6bc] sm:$0xff]
    %v590 = vld [vmem:[#allocation9 + $0x6c4] sm:$0xff]
    %v591 = vld [vmem:[#allocation9 + $0x6cc] sm:$0xff]
    %v592 = vld [vmem:[#allocation9 + $0x6d4] sm:$0xff]
    %v593 = vld [vmem:[#allocation9 + $0x6dc] sm:$0xf]
    %v594 = vld [vmem:[#allocation9 + $0x6e0] sm:$0xff]
    %v595 = vld [vmem:[#allocation9 + $0x6e8] sm:$0xff]
    %v596 = vld [vmem:[#allocation9 + $0x6f0] sm:$0xff]
    %v597 = vld [vmem:[#allocation9 + $0x6f8] sm:$0xff]
    %v598 = vld [vmem:[#allocation9 + $0x700] sm:$0xff]
    %v599 = vld [vmem:[#allocation9 + $0x708] sm:$0xf]
    %v600 = vld [vmem:[#allocation9 + $0x70c] sm:$0xff]
    %v601 = vld [vmem:[#allocation9 + $0x714] sm:$0xff]
    %v602 = vld [vmem:[#allocation9 + $0x71c] sm:$0xff]
    %v603 = vld [vmem:[#allocation9 + $0x724] sm:$0xff]
    %v604 = vld [vmem:[#allocation9 + $0x72c] sm:$0xff]
    %v605 = vld [vmem:[#allocation9 + $0x734] sm:$0xf]
    %v606 = vld [vmem:[#allocation6] ss:$8 sm:$0xf]
    %v607 = vld [vmem:[#allocation6] ss:$8 sm:$0xf0]
    %v608 = vor.u32 %v606, %v607
    %s609 = scalar_lea.vmem [#allocation6], 64
    %v610 = vld [vmem:[%s609] ss:$8 sm:$0x7]
    %v863 = vunpack.c.l.b16 %v354
    %v864 = vunpack.c.h.b16 %v354
    %v865 = vunpack.c.l.b16 %v355
    %v866 = vunpack.c.h.b16 %v355
    %v867 = vunpack.c.l.b16 %v356
    %v868 = vunpack.c.h.b16 %v356
    %v869 = vunpack.c.l.b16 %v357
    %v870 = vunpack.c.h.b16 %v357
    %v871 = vunpack.c.l.b16 %v358
    %v872 = vunpack.c.h.b16 %v358
    %v873 = vunpack.c.l.b16 %v359
    %v874 = vunpack.c.l.b16 %v360
    %v875 = vunpack.c.h.b16 %v360
    %v876 = vunpack.c.l.b16 %v361
    %v877 = vunpack.c.h.b16 %v361
    %v878 = vunpack.c.l.b16 %v362
    %v879 = vunpack.c.h.b16 %v362
    %v880 = vunpack.c.l.b16 %v363
    %v881 = vunpack.c.h.b16 %v363
    %v882 = vunpack.c.l.b16 %v364
    %v883 = vunpack.c.h.b16 %v364
    %v884 = vunpack.c.l.b16 %v365
    %v885 = vunpack.c.l.b16 %v366
    %v886 = vunpack.c.h.b16 %v366
    %v887 = vunpack.c.l.b16 %v367
    %v888 = vunpack.c.h.b16 %v367
    %v889 = vunpack.c.l.b16 %v368
    %v890 = vunpack.c.h.b16 %v368
    %v891 = vunpack.c.l.b16 %v369
    %v892 = vunpack.c.h.b16 %v369
    %v893 = vunpack.c.l.b16 %v370
    %v894 = vunpack.c.h.b16 %v370
    %v895 = vunpack.c.l.b16 %v371
    %v896 = vunpack.c.l.b16 %v372
    %v897 = vunpack.c.h.b16 %v372
    %v898 = vunpack.c.l.b16 %v373
    %v899 = vunpack.c.h.b16 %v373
    %v900 = vunpack.c.l.b16 %v374
    %v901 = vunpack.c.h.b16 %v374
    %v902 = vunpack.c.l.b16 %v375
    %v903 = vunpack.c.h.b16 %v375
    %v904 = vunpack.c.l.b16 %v376
    %v905 = vunpack.c.h.b16 %v376
    %v906 = vunpack.c.l.b16 %v377
    %v907 = vunpack.c.l.b16 %v378
    %v908 = vunpack.c.h.b16 %v378
    %v909 = vunpack.c.l.b16 %v379
    %v910 = vunpack.c.h.b16 %v379
    %v911 = vunpack.c.l.b16 %v380
    %v912 = vunpack.c.h.b16 %v380
    %v913 = vunpack.c.l.b16 %v381
    %v914 = vunpack.c.h.b16 %v381
    %v915 = vunpack.c.l.b16 %v382
    %v916 = vunpack.c.h.b16 %v382
    %v917 = vunpack.c.l.b16 %v383
    %v918 = vunpack.c.l.b16 %v384
    %v919 = vunpack.c.h.b16 %v384
    %v920 = vunpack.c.l.b16 %v385
    %v921 = vunpack.c.h.b16 %v385
    %v922 = vunpack.c.l.b16 %v386
    %v923 = vunpack.c.h.b16 %v386
    %v924 = vunpack.c.l.b16 %v387
    %v925 = vunpack.c.h.b16 %v387
    %v926 = vunpack.c.l.b16 %v388
    %v927 = vunpack.c.h.b16 %v388
    %v928 = vunpack.c.l.b16 %v389
    %v929 = vunpack.c.l.b16 %v390
    %v930 = vunpack.c.h.b16 %v390
    %v931 = vunpack.c.l.b16 %v391
    %v932 = vunpack.c.h.b16 %v391
    %v933 = vunpack.c.l.b16 %v392
    %v934 = vunpack.c.h.b16 %v392
    %v935 = vunpack.c.l.b16 %v393
    %v936 = vunpack.c.h.b16 %v393
    %v937 = vunpack.c.l.b16 %v394
    %v938 = vunpack.c.h.b16 %v394
    %v939 = vunpack.c.l.b16 %v395
    %v940 = vunpack.c.l.b16 %v396
    %v941 = vunpack.c.h.b16 %v396
    %v942 = vunpack.c.l.b16 %v397
    %v943 = vunpack.c.h.b16 %v397
    %v944 = vunpack.c.l.b16 %v398
    %v945 = vunpack.c.h.b16 %v398
    %v946 = vunpack.c.l.b16 %v399
    %v947 = vunpack.c.h.b16 %v399
    %v948 = vunpack.c.l.b16 %v400
    %v949 = vunpack.c.h.b16 %v400
    %v950 = vunpack.c.l.b16 %v401
    %v951 = vunpack.c.l.b16 %v402
    %v952 = vunpack.c.h.b16 %v402
    %v953 = vunpack.c.l.b16 %v403
    %v954 = vunpack.c.h.b16 %v403
    %v955 = vunpack.c.l.b16 %v404
    %v956 = vunpack.c.h.b16 %v404
    %v957 = vunpack.c.l.b16 %v405
    %v958 = vunpack.c.h.b16 %v405
    %v959 = vunpack.c.l.b16 %v406
    %v960 = vunpack.c.h.b16 %v406
    %v961 = vunpack.c.l.b16 %v407
    %v962 = vunpack.c.l.b16 %v408
    %v963 = vunpack.c.h.b16 %v408
    %v964 = vunpack.c.l.b16 %v409
    %v965 = vunpack.c.h.b16 %v409
    %v966 = vunpack.c.l.b16 %v410
    %v967 = vunpack.c.h.b16 %v410
    %v968 = vunpack.c.l.b16 %v411
    %v969 = vunpack.c.h.b16 %v411
    %v970 = vunpack.c.l.b16 %v412
    %v971 = vunpack.c.h.b16 %v412
    %v972 = vunpack.c.l.b16 %v413
    %v973 = vunpack.c.l.b16 %v414
    %v974 = vunpack.c.h.b16 %v414
    %v975 = vunpack.c.l.b16 %v415
    %v976 = vunpack.c.h.b16 %v415
    %v977 = vunpack.c.l.b16 %v416
    %v978 = vunpack.c.h.b16 %v416
    %v979 = vunpack.c.l.b16 %v417
    %v980 = vunpack.c.h.b16 %v417
    %v981 = vunpack.c.l.b16 %v418
    %v982 = vunpack.c.h.b16 %v418
    %v983 = vunpack.c.l.b16 %v419
    %v984 = vunpack.c.l.b16 %v420
    %v985 = vunpack.c.h.b16 %v420
    %v986 = vunpack.c.l.b16 %v421
    %v987 = vunpack.c.h.b16 %v421
    %v988 = vunpack.c.l.b16 %v422
    %v989 = vunpack.c.h.b16 %v422
    %v990 = vunpack.c.l.b16 %v423
    %v991 = vunpack.c.h.b16 %v423
    %v992 = vunpack.c.l.b16 %v424
    %v993 = vunpack.c.h.b16 %v424
    %v994 = vunpack.c.l.b16 %v425
    %v995 = vunpack.c.l.b16 %v426
    %v996 = vunpack.c.h.b16 %v426
    %v997 = vunpack.c.l.b16 %v427
    %v998 = vunpack.c.h.b16 %v427
    %v999 = vunpack.c.l.b16 %v428
    %v1000 = vunpack.c.h.b16 %v428
    %v1001 = vunpack.c.l.b16 %v429
    %v1002 = vunpack.c.h.b16 %v429
    %v1003 = vunpack.c.l.b16 %v430
    %v1004 = vunpack.c.h.b16 %v430
    %v1005 = vunpack.c.l.b16 %v431
    %v1006 = vunpack.c.l.b16 %v432
    %v1007 = vunpack.c.h.b16 %v432
    %v1008 = vunpack.c.l.b16 %v433
    %v1009 = vunpack.c.h.b16 %v433
    %v1010 = vunpack.c.l.b16 %v434
    %v1011 = vunpack.c.h.b16 %v434
    %v1012 = vunpack.c.l.b16 %v435
    %v1013 = vunpack.c.h.b16 %v435
    %v1014 = vunpack.c.l.b16 %v436
    %v1015 = vunpack.c.h.b16 %v436
    %v1016 = vunpack.c.l.b16 %v437
    %v1017 = vunpack.c.l.b16 %v438
    %v1018 = vunpack.c.h.b16 %v438
    %v1019 = vunpack.c.l.b16 %v439
    %v1020 = vunpack.c.h.b16 %v439
    %v1021 = vunpack.c.l.b16 %v440
    %v1022 = vunpack.c.h.b16 %v440
    %v1023 = vunpack.c.l.b16 %v441
    %v1024 = vunpack.c.h.b16 %v441
    %v1025 = vunpack.c.l.b16 %v442
    %v1026 = vunpack.c.h.b16 %v442
    %v1027 = vunpack.c.l.b16 %v443
    %v1028 = vunpack.c.l.b16 %v444
    %v1029 = vunpack.c.h.b16 %v444
    %v1030 = vunpack.c.l.b16 %v445
    %v1031 = vunpack.c.h.b16 %v445
    %v1032 = vunpack.c.l.b16 %v446
    %v1033 = vunpack.c.h.b16 %v446
    %v1034 = vunpack.c.l.b16 %v447
    %v1035 = vunpack.c.h.b16 %v447
    %v1036 = vunpack.c.l.b16 %v448
    %v1037 = vunpack.c.h.b16 %v448
    %v1038 = vunpack.c.l.b16 %v449
    %v1039 = vunpack.c.l.b16 %v450
    %v1040 = vunpack.c.h.b16 %v450
    %v1041 = vunpack.c.l.b16 %v451
    %v1042 = vunpack.c.h.b16 %v451
    %v1043 = vunpack.c.l.b16 %v452
    %v1044 = vunpack.c.h.b16 %v452
    %v1045 = vunpack.c.l.b16 %v453
    %v1046 = vunpack.c.h.b16 %v453
    %v1047 = vunpack.c.l.b16 %v454
    %v1048 = vunpack.c.h.b16 %v454
    %v1049 = vunpack.c.l.b16 %v455
    %v1050 = vunpack.c.l.b16 %v456
    %v1051 = vunpack.c.h.b16 %v456
    %v1052 = vunpack.c.l.b16 %v457
    %v1053 = vunpack.c.h.b16 %v457
    %v1054 = vunpack.c.l.b16 %v458
    %v1055 = vunpack.c.h.b16 %v458
    %v1056 = vunpack.c.l.b16 %v459
    %v1057 = vunpack.c.h.b16 %v459
    %v1058 = vunpack.c.l.b16 %v460
    %v1059 = vunpack.c.h.b16 %v460
    %v1060 = vunpack.c.l.b16 %v461
    %v1061 = vunpack.c.l.b16 %v462
    %v1062 = vunpack.c.h.b16 %v462
    %v1063 = vunpack.c.l.b16 %v463
    %v1064 = vunpack.c.h.b16 %v463
    %v1065 = vunpack.c.l.b16 %v464
    %v1066 = vunpack.c.h.b16 %v464
    %v1067 = vunpack.c.l.b16 %v465
    %v1068 = vunpack.c.h.b16 %v465
    %v1069 = vunpack.c.l.b16 %v466
    %v1070 = vunpack.c.h.b16 %v466
    %v1071 = vunpack.c.l.b16 %v467
    %v1072 = vunpack.c.l.b16 %v468
    %v1073 = vunpack.c.h.b16 %v468
    %v1074 = vunpack.c.l.b16 %v469
    %v1075 = vunpack.c.h.b16 %v469
    %v1076 = vunpack.c.l.b16 %v470
    %v1077 = vunpack.c.h.b16 %v470
    %v1078 = vunpack.c.l.b16 %v471
    %v1079 = vunpack.c.h.b16 %v471
    %v1080 = vunpack.c.l.b16 %v472
    %v1081 = vunpack.c.h.b16 %v472
    %v1082 = vunpack.c.l.b16 %v473
    %v1083 = vunpack.c.l.b16 %v474
    %v1084 = vunpack.c.h.b16 %v474
    %v1085 = vunpack.c.l.b16 %v475
    %v1086 = vunpack.c.h.b16 %v475
    %v1087 = vunpack.c.l.b16 %v476
    %v1088 = vunpack.c.h.b16 %v476
    %v1089 = vunpack.c.l.b16 %v477
    %v1090 = vunpack.c.h.b16 %v477
    %v1091 = vunpack.c.l.b16 %v478
    %v1092 = vunpack.c.h.b16 %v478
    %v1093 = vunpack.c.l.b16 %v479
    %v1094 = vunpack.c.l.b16 %v480
    %v1095 = vunpack.c.h.b16 %v480
    %v1096 = vunpack.c.l.b16 %v481
    %v1097 = vunpack.c.h.b16 %v481
    %v1098 = vunpack.c.l.b16 %v482
    %v1099 = vunpack.c.h.b16 %v482
    %v1100 = vunpack.c.l.b16 %v483
    %v1101 = vunpack.c.h.b16 %v483
    %v1102 = vunpack.c.l.b16 %v484
    %v1103 = vunpack.c.h.b16 %v484
    %v1104 = vunpack.c.l.b16 %v485
    %v1105 = vunpack.c.l.b16 %v486
    %v1106 = vunpack.c.h.b16 %v486
    %v1107 = vunpack.c.l.b16 %v487
    %v1108 = vunpack.c.h.b16 %v487
    %v1109 = vunpack.c.l.b16 %v488
    %v1110 = vunpack.c.h.b16 %v488
    %v1111 = vunpack.c.l.b16 %v489
    %v1112 = vunpack.c.h.b16 %v489
    %v1113 = vunpack.c.l.b16 %v490
    %v1114 = vunpack.c.h.b16 %v490
    %v1115 = vunpack.c.l.b16 %v491
    %v1116 = vunpack.c.l.b16 %v492
    %v1117 = vunpack.c.h.b16 %v492
    %v1118 = vunpack.c.l.b16 %v493
    %v1119 = vunpack.c.h.b16 %v493
    %v1120 = vunpack.c.l.b16 %v494
    %v1121 = vunpack.c.h.b16 %v494
    %v1122 = vunpack.c.l.b16 %v495
    %v1123 = vunpack.c.h.b16 %v495
    %v1124 = vunpack.c.l.b16 %v496
    %v1125 = vunpack.c.h.b16 %v496
    %v1126 = vunpack.c.l.b16 %v497
    %v1127 = vunpack.c.l.b16 %v498
    %v1128 = vunpack.c.h.b16 %v498
    %v1129 = vunpack.c.l.b16 %v499
    %v1130 = vunpack.c.h.b16 %v499
    %v1131 = vunpack.c.l.b16 %v500
    %v1132 = vunpack.c.h.b16 %v500
    %v1133 = vunpack.c.l.b16 %v501
    %v1134 = vunpack.c.h.b16 %v501
    %v1135 = vunpack.c.l.b16 %v502
    %v1136 = vunpack.c.h.b16 %v502
    %v1137 = vunpack.c.l.b16 %v503
    %v1138 = vunpack.c.l.b16 %v504
    %v1139 = vunpack.c.h.b16 %v504
    %v1140 = vunpack.c.l.b16 %v505
    %v1141 = vunpack.c.h.b16 %v505
    %v1142 = vunpack.c.l.b16 %v506
    %v1143 = vunpack.c.h.b16 %v506
    %v1144 = vunpack.c.l.b16 %v507
    %v1145 = vunpack.c.h.b16 %v507
    %v1146 = vunpack.c.l.b16 %v508
    %v1147 = vunpack.c.h.b16 %v508
    %v1148 = vunpack.c.l.b16 %v509
    %v1149 = vunpack.c.l.b16 %v510
    %v1150 = vunpack.c.h.b16 %v510
    %v1151 = vunpack.c.l.b16 %v511
    %v1152 = vunpack.c.h.b16 %v511
    %v1153 = vunpack.c.l.b16 %v512
    %v1154 = vunpack.c.h.b16 %v512
    %v1155 = vunpack.c.l.b16 %v513
    %v1156 = vunpack.c.h.b16 %v513
    %v1157 = vunpack.c.l.b16 %v514
    %v1158 = vunpack.c.h.b16 %v514
    %v1159 = vunpack.c.l.b16 %v515
    %v1160 = vunpack.c.l.b16 %v516
    %v1161 = vunpack.c.h.b16 %v516
    %v1162 = vunpack.c.l.b16 %v517
    %v1163 = vunpack.c.h.b16 %v517
    %v1164 = vunpack.c.l.b16 %v518
    %v1165 = vunpack.c.h.b16 %v518
    %v1166 = vunpack.c.l.b16 %v519
    %v1167 = vunpack.c.h.b16 %v519
    %v1168 = vunpack.c.l.b16 %v520
    %v1169 = vunpack.c.h.b16 %v520
    %v1170 = vunpack.c.l.b16 %v521
    %v1171 = vunpack.c.l.b16 %v522
    %v1172 = vunpack.c.h.b16 %v522
    %v1173 = vunpack.c.l.b16 %v523
    %v1174 = vunpack.c.h.b16 %v523
    %v1175 = vunpack.c.l.b16 %v524
    %v1176 = vunpack.c.h.b16 %v524
    %v1177 = vunpack.c.l.b16 %v525
    %v1178 = vunpack.c.h.b16 %v525
    %v1179 = vunpack.c.l.b16 %v526
    %v1180 = vunpack.c.h.b16 %v526
    %v1181 = vunpack.c.l.b16 %v527
    %v1182 = vunpack.c.l.b16 %v528
    %v1183 = vunpack.c.h.b16 %v528
    %v1184 = vunpack.c.l.b16 %v529
    %v1185 = vunpack.c.h.b16 %v529
    %v1186 = vunpack.c.l.b16 %v530
    %v1187 = vunpack.c.h.b16 %v530
    %v1188 = vunpack.c.l.b16 %v531
    %v1189 = vunpack.c.h.b16 %v531
    %v1190 = vunpack.c.l.b16 %v532
    %v1191 = vunpack.c.h.b16 %v532
    %v1192 = vunpack.c.l.b16 %v533
    %v1193 = vunpack.c.l.b16 %v534
    %v1194 = vunpack.c.h.b16 %v534
    %v1195 = vunpack.c.l.b16 %v535
    %v1196 = vunpack.c.h.b16 %v535
    %v1197 = vunpack.c.l.b16 %v536
    %v1198 = vunpack.c.h.b16 %v536
    %v1199 = vunpack.c.l.b16 %v537
    %v1200 = vunpack.c.h.b16 %v537
    %v1201 = vunpack.c.l.b16 %v538
    %v1202 = vunpack.c.h.b16 %v538
    %v1203 = vunpack.c.l.b16 %v539
    %v1204 = vunpack.c.l.b16 %v540
    %v1205 = vunpack.c.h.b16 %v540
    %v1206 = vunpack.c.l.b16 %v541
    %v1207 = vunpack.c.h.b16 %v541
    %v1208 = vunpack.c.l.b16 %v542
    %v1209 = vunpack.c.h.b16 %v542
    %v1210 = vunpack.c.l.b16 %v543
    %v1211 = vunpack.c.h.b16 %v543
    %v1212 = vunpack.c.l.b16 %v544
    %v1213 = vunpack.c.h.b16 %v544
    %v1214 = vunpack.c.l.b16 %v545
    %v1215 = vunpack.c.l.b16 %v546
    %v1216 = vunpack.c.h.b16 %v546
    %v1217 = vunpack.c.l.b16 %v547
    %v1218 = vunpack.c.h.b16 %v547
    %v1219 = vunpack.c.l.b16 %v548
    %v1220 = vunpack.c.h.b16 %v548
    %v1221 = vunpack.c.l.b16 %v549
    %v1222 = vunpack.c.h.b16 %v549
    %v1223 = vunpack.c.l.b16 %v550
    %v1224 = vunpack.c.h.b16 %v550
    %v1225 = vunpack.c.l.b16 %v551
    %v1226 = vunpack.c.l.b16 %v552
    %v1227 = vunpack.c.h.b16 %v552
    %v1228 = vunpack.c.l.b16 %v553
    %v1229 = vunpack.c.h.b16 %v553
    %v1230 = vunpack.c.l.b16 %v554
    %v1231 = vunpack.c.h.b16 %v554
    %v1232 = vunpack.c.l.b16 %v555
    %v1233 = vunpack.c.h.b16 %v555
    %v1234 = vunpack.c.l.b16 %v556
    %v1235 = vunpack.c.h.b16 %v556
    %v1236 = vunpack.c.l.b16 %v557
    %v1237 = vunpack.c.l.b16 %v558
    %v1238 = vunpack.c.h.b16 %v558
    %v1239 = vunpack.c.l.b16 %v559
    %v1240 = vunpack.c.h.b16 %v559
    %v1241 = vunpack.c.l.b16 %v560
    %v1242 = vunpack.c.h.b16 %v560
    %v1243 = vunpack.c.l.b16 %v561
    %v1244 = vunpack.c.h.b16 %v561
    %v1245 = vunpack.c.l.b16 %v562
    %v1246 = vunpack.c.h.b16 %v562
    %v1247 = vunpack.c.l.b16 %v563
    %v1248 = vunpack.c.l.b16 %v564
    %v1249 = vunpack.c.h.b16 %v564
    %v1250 = vunpack.c.l.b16 %v565
    %v1251 = vunpack.c.h.b16 %v565
    %v1252 = vunpack.c.l.b16 %v566
    %v1253 = vunpack.c.h.b16 %v566
    %v1254 = vunpack.c.l.b16 %v567
    %v1255 = vunpack.c.h.b16 %v567
    %v1256 = vunpack.c.l.b16 %v568
    %v1257 = vunpack.c.h.b16 %v568
    %v1258 = vunpack.c.l.b16 %v569
    %v1259 = vunpack.c.l.b16 %v570
    %v1260 = vunpack.c.h.b16 %v570
    %v1261 = vunpack.c.l.b16 %v571
    %v1262 = vunpack.c.h.b16 %v571
    %v1263 = vunpack.c.l.b16 %v572
    %v1264 = vunpack.c.h.b16 %v572
    %v1265 = vunpack.c.l.b16 %v573
    %v1266 = vunpack.c.h.b16 %v573
    %v1267 = vunpack.c.l.b16 %v574
    %v1268 = vunpack.c.h.b16 %v574
    %v1269 = vunpack.c.l.b16 %v575
    %v1270 = vunpack.c.l.b16 %v576
    %v1271 = vunpack.c.h.b16 %v576
    %v1272 = vunpack.c.l.b16 %v577
    %v1273 = vunpack.c.h.b16 %v577
    %v1274 = vunpack.c.l.b16 %v578
    %v1275 = vunpack.c.h.b16 %v578
    %v1276 = vunpack.c.l.b16 %v579
    %v1277 = vunpack.c.h.b16 %v579
    %v1278 = vunpack.c.l.b16 %v580
    %v1279 = vunpack.c.h.b16 %v580
    %v1280 = vunpack.c.l.b16 %v581
    %v1281 = vunpack.c.l.b16 %v582
    %v1282 = vunpack.c.h.b16 %v582
    %v1283 = vunpack.c.l.b16 %v583
    %v1284 = vunpack.c.h.b16 %v583
    %v1285 = vunpack.c.l.b16 %v584
    %v1286 = vunpack.c.h.b16 %v584
    %v1287 = vunpack.c.l.b16 %v585
    %v1288 = vunpack.c.h.b16 %v585
    %v1289 = vunpack.c.l.b16 %v586
    %v1290 = vunpack.c.h.b16 %v586
    %v1291 = vunpack.c.l.b16 %v587
    %v1292 = vunpack.c.l.b16 %v588
    %v1293 = vunpack.c.h.b16 %v588
    %v1294 = vunpack.c.l.b16 %v589
    %v1295 = vunpack.c.h.b16 %v589
    %v1296 = vunpack.c.l.b16 %v590
    %v1297 = vunpack.c.h.b16 %v590
    %v1298 = vunpack.c.l.b16 %v591
    %v1299 = vunpack.c.h.b16 %v591
    %v1300 = vunpack.c.l.b16 %v592
    %v1301 = vunpack.c.h.b16 %v592
    %v1302 = vunpack.c.l.b16 %v593
    %v1303 = vunpack.c.l.b16 %v594
    %v1304 = vunpack.c.h.b16 %v594
    %v1305 = vunpack.c.l.b16 %v595
    %v1306 = vunpack.c.h.b16 %v595
    %v1307 = vunpack.c.l.b16 %v596
    %v1308 = vunpack.c.h.b16 %v596
    %v1309 = vunpack.c.l.b16 %v597
    %v1310 = vunpack.c.h.b16 %v597
    %v1311 = vunpack.c.l.b16 %v598
    %v1312 = vunpack.c.h.b16 %v598
    %v1313 = vunpack.c.l.b16 %v599
    %v1314 = vunpack.c.l.b16 %v600
    %v1315 = vunpack.c.h.b16 %v600
    %v1316 = vunpack.c.l.b16 %v601
    %v1317 = vunpack.c.h.b16 %v601
    %v1318 = vunpack.c.l.b16 %v602
    %v1319 = vunpack.c.h.b16 %v602
    %v1320 = vunpack.c.l.b16 %v603
    %v1321 = vunpack.c.h.b16 %v603
    %v1322 = vunpack.c.l.b16 %v604
    %v1323 = vunpack.c.h.b16 %v604
    %v1324 = vunpack.c.l.b16 %v605
    %v1325 = vpack.c.b16 %v874, %v863
    %v1326 = vpack.c.b16 %v875, %v864
    %v1327 = vpack.c.b16 %v876, %v865
    %v1328 = vpack.c.b16 %v877, %v866
    %v1329 = vpack.c.b16 %v878, %v867
    %v1330 = vpack.c.b16 %v879, %v868
    %v1331 = vpack.c.b16 %v880, %v869
    %v1332 = vpack.c.b16 %v881, %v870
    %v1333 = vpack.c.b16 %v882, %v871
    %v1334 = vpack.c.b16 %v883, %v872
    %v1335 = vpack.c.b16 %v884, %v873
    %v1336 = vpack.c.b16 %v896, %v885
    %v1337 = vpack.c.b16 %v897, %v886
    %v1338 = vpack.c.b16 %v898, %v887
    %v1339 = vpack.c.b16 %v899, %v888
    %v1340 = vpack.c.b16 %v900, %v889
    %v1341 = vpack.c.b16 %v901, %v890
    %v1342 = vpack.c.b16 %v902, %v891
    %v1343 = vpack.c.b16 %v903, %v892
    %v1344 = vpack.c.b16 %v904, %v893
    %v1345 = vpack.c.b16 %v905, %v894
    %v1346 = vpack.c.b16 %v906, %v895
    %v1347 = vpack.c.b16 %v918, %v907
    %v1348 = vpack.c.b16 %v919, %v908
    %v1349 = vpack.c.b16 %v920, %v909
    %v1350 = vpack.c.b16 %v921, %v910
    %v1351 = vpack.c.b16 %v922, %v911
    %v1352 = vpack.c.b16 %v923, %v912
    %v1353 = vpack.c.b16 %v924, %v913
    %v1354 = vpack.c.b16 %v925, %v914
    %v1355 = vpack.c.b16 %v926, %v915
    %v1356 = vpack.c.b16 %v927, %v916
    %v1357 = vpack.c.b16 %v928, %v917
    %v1358 = vpack.c.b16 %v940, %v929
    %v1359 = vpack.c.b16 %v941, %v930
    %v1360 = vpack.c.b16 %v942, %v931
    %v1361 = vpack.c.b16 %v943, %v932
    %v1362 = vpack.c.b16 %v944, %v933
    %v1363 = vpack.c.b16 %v945, %v934
    %v1364 = vpack.c.b16 %v946, %v935
    %v1365 = vpack.c.b16 %v947, %v936
    %v1366 = vpack.c.b16 %v948, %v937
    %v1367 = vpack.c.b16 %v949, %v938
    %v1368 = vpack.c.b16 %v950, %v939
    %v1369 = vpack.c.b16 %v962, %v951
    %v1370 = vpack.c.b16 %v963, %v952
    %v1371 = vpack.c.b16 %v964, %v953
    %v1372 = vpack.c.b16 %v965, %v954
    %v1373 = vpack.c.b16 %v966, %v955
    %v1374 = vpack.c.b16 %v967, %v956
    %v1375 = vpack.c.b16 %v968, %v957
    %v1376 = vpack.c.b16 %v969, %v958
    %v1377 = vpack.c.b16 %v970, %v959
    %v1378 = vpack.c.b16 %v971, %v960
    %v1379 = vpack.c.b16 %v972, %v961
    %v1380 = vpack.c.b16 %v984, %v973
    %v1381 = vpack.c.b16 %v985, %v974
    %v1382 = vpack.c.b16 %v986, %v975
    %v1383 = vpack.c.b16 %v987, %v976
    %v1384 = vpack.c.b16 %v988, %v977
    %v1385 = vpack.c.b16 %v989, %v978
    %v1386 = vpack.c.b16 %v990, %v979
    %v1387 = vpack.c.b16 %v991, %v980
    %v1388 = vpack.c.b16 %v992, %v981
    %v1389 = vpack.c.b16 %v993, %v982
    %v1390 = vpack.c.b16 %v994, %v983
    %v1391 = vpack.c.b16 %v1006, %v995
    %v1392 = vpack.c.b16 %v1007, %v996
    %v1393 = vpack.c.b16 %v1008, %v997
    %v1394 = vpack.c.b16 %v1009, %v998
    %v1395 = vpack.c.b16 %v1010, %v999
    %v1396 = vpack.c.b16 %v1011, %v1000
    %v1397 = vpack.c.b16 %v1012, %v1001
    %v1398 = vpack.c.b16 %v1013, %v1002
    %v1399 = vpack.c.b16 %v1014, %v1003
    %v1400 = vpack.c.b16 %v1015, %v1004
    %v1401 = vpack.c.b16 %v1016, %v1005
    %v1402 = vpack.c.b16 %v1028, %v1017
    %v1403 = vpack.c.b16 %v1029, %v1018
    %v1404 = vpack.c.b16 %v1030, %v1019
    %v1405 = vpack.c.b16 %v1031, %v1020
    %v1406 = vpack.c.b16 %v1032, %v1021
    %v1407 = vpack.c.b16 %v1033, %v1022
    %v1408 = vpack.c.b16 %v1034, %v1023
    %v1409 = vpack.c.b16 %v1035, %v1024
    %v1410 = vpack.c.b16 %v1036, %v1025
    %v1411 = vpack.c.b16 %v1037, %v1026
    %v1412 = vpack.c.b16 %v1038, %v1027
    %v1413 = vpack.c.b16 %v1050, %v1039
    %v1414 = vpack.c.b16 %v1051, %v1040
    %v1415 = vpack.c.b16 %v1052, %v1041
    %v1416 = vpack.c.b16 %v1053, %v1042
    %v1417 = vpack.c.b16 %v1054, %v1043
    %v1418 = vpack.c.b16 %v1055, %v1044
    %v1419 = vpack.c.b16 %v1056, %v1045
    %v1420 = vpack.c.b16 %v1057, %v1046
    %v1421 = vpack.c.b16 %v1058, %v1047
    %v1422 = vpack.c.b16 %v1059, %v1048
    %v1423 = vpack.c.b16 %v1060, %v1049
    %v1424 = vpack.c.b16 %v1072, %v1061
    %v1425 = vpack.c.b16 %v1073, %v1062
    %v1426 = vpack.c.b16 %v1074, %v1063
    %v1427 = vpack.c.b16 %v1075, %v1064
    %v1428 = vpack.c.b16 %v1076, %v1065
    %v1429 = vpack.c.b16 %v1077, %v1066
    %v1430 = vpack.c.b16 %v1078, %v1067
    %v1431 = vpack.c.b16 %v1079, %v1068
    %v1432 = vpack.c.b16 %v1080, %v1069
    %v1433 = vpack.c.b16 %v1081, %v1070
    %v1434 = vpack.c.b16 %v1082, %v1071
    %v1435 = vpack.c.b16 %v1094, %v1083
    %v1436 = vpack.c.b16 %v1095, %v1084
    %v1437 = vpack.c.b16 %v1096, %v1085
    %v1438 = vpack.c.b16 %v1097, %v1086
    %v1439 = vpack.c.b16 %v1098, %v1087
    %v1440 = vpack.c.b16 %v1099, %v1088
    %v1441 = vpack.c.b16 %v1100, %v1089
    %v1442 = vpack.c.b16 %v1101, %v1090
    %v1443 = vpack.c.b16 %v1102, %v1091
    %v1444 = vpack.c.b16 %v1103, %v1092
    %v1445 = vpack.c.b16 %v1104, %v1093
    %v1446 = vpack.c.b16 %v1116, %v1105
    %v1447 = vpack.c.b16 %v1117, %v1106
    %v1448 = vpack.c.b16 %v1118, %v1107
    %v1449 = vpack.c.b16 %v1119, %v1108
    %v1450 = vpack.c.b16 %v1120, %v1109
    %v1451 = vpack.c.b16 %v1121, %v1110
    %v1452 = vpack.c.b16 %v1122, %v1111
    %v1453 = vpack.c.b16 %v1123, %v1112
    %v1454 = vpack.c.b16 %v1124, %v1113
    %v1455 = vpack.c.b16 %v1125, %v1114
    %v1456 = vpack.c.b16 %v1126, %v1115
    %v1457 = vpack.c.b16 %v1138, %v1127
    %v1458 = vpack.c.b16 %v1139, %v1128
    %v1459 = vpack.c.b16 %v1140, %v1129
    %v1460 = vpack.c.b16 %v1141, %v1130
    %v1461 = vpack.c.b16 %v1142, %v1131
    %v1462 = vpack.c.b16 %v1143, %v1132
    %v1463 = vpack.c.b16 %v1144, %v1133
    %v1464 = vpack.c.b16 %v1145, %v1134
    %v1465 = vpack.c.b16 %v1146, %v1135
    %v1466 = vpack.c.b16 %v1147, %v1136
    %v1467 = vpack.c.b16 %v1148, %v1137
    %v1468 = vpack.c.b16 %v1160, %v1149
    %v1469 = vpack.c.b16 %v1161, %v1150
    %v1470 = vpack.c.b16 %v1162, %v1151
    %v1471 = vpack.c.b16 %v1163, %v1152
    %v1472 = vpack.c.b16 %v1164, %v1153
    %v1473 = vpack.c.b16 %v1165, %v1154
    %v1474 = vpack.c.b16 %v1166, %v1155
    %v1475 = vpack.c.b16 %v1167, %v1156
    %v1476 = vpack.c.b16 %v1168, %v1157
    %v1477 = vpack.c.b16 %v1169, %v1158
    %v1478 = vpack.c.b16 %v1170, %v1159
    %v1479 = vpack.c.b16 %v1182, %v1171
    %v1480 = vpack.c.b16 %v1183, %v1172
    %v1481 = vpack.c.b16 %v1184, %v1173
    %v1482 = vpack.c.b16 %v1185, %v1174
    %v1483 = vpack.c.b16 %v1186, %v1175
    %v1484 = vpack.c.b16 %v1187, %v1176
    %v1485 = vpack.c.b16 %v1188, %v1177
    %v1486 = vpack.c.b16 %v1189, %v1178
    %v1487 = vpack.c.b16 %v1190, %v1179
    %v1488 = vpack.c.b16 %v1191, %v1180
    %v1489 = vpack.c.b16 %v1192, %v1181
    %v1490 = vpack.c.b16 %v1204, %v1193
    %v1491 = vpack.c.b16 %v1205, %v1194
    %v1492 = vpack.c.b16 %v1206, %v1195
    %v1493 = vpack.c.b16 %v1207, %v1196
    %v1494 = vpack.c.b16 %v1208, %v1197
    %v1495 = vpack.c.b16 %v1209, %v1198
    %v1496 = vpack.c.b16 %v1210, %v1199
    %v1497 = vpack.c.b16 %v1211, %v1200
    %v1498 = vpack.c.b16 %v1212, %v1201
    %v1499 = vpack.c.b16 %v1213, %v1202
    %v1500 = vpack.c.b16 %v1214, %v1203
    %v1501 = vpack.c.b16 %v1226, %v1215
    %v1502 = vpack.c.b16 %v1227, %v1216
    %v1503 = vpack.c.b16 %v1228, %v1217
    %v1504 = vpack.c.b16 %v1229, %v1218
    %v1505 = vpack.c.b16 %v1230, %v1219
    %v1506 = vpack.c.b16 %v1231, %v1220
    %v1507 = vpack.c.b16 %v1232, %v1221
    %v1508 = vpack.c.b16 %v1233, %v1222
    %v1509 = vpack.c.b16 %v1234, %v1223
    %v1510 = vpack.c.b16 %v1235, %v1224
    %v1511 = vpack.c.b16 %v1236, %v1225
    %v1512 = vpack.c.b16 %v1248, %v1237
    %v1513 = vpack.c.b16 %v1249, %v1238
    %v1514 = vpack.c.b16 %v1250, %v1239
    %v1515 = vpack.c.b16 %v1251, %v1240
    %v1516 = vpack.c.b16 %v1252, %v1241
    %v1517 = vpack.c.b16 %v1253, %v1242
    %v1518 = vpack.c.b16 %v1254, %v1243
    %v1519 = vpack.c.b16 %v1255, %v1244
    %v1520 = vpack.c.b16 %v1256, %v1245
    %v1521 = vpack.c.b16 %v1257, %v1246
    %v1522 = vpack.c.b16 %v1258, %v1247
    %v1523 = vpack.c.b16 %v1270, %v1259
    %v1524 = vpack.c.b16 %v1271, %v1260
    %v1525 = vpack.c.b16 %v1272, %v1261
    %v1526 = vpack.c.b16 %v1273, %v1262
    %v1527 = vpack.c.b16 %v1274, %v1263
    %v1528 = vpack.c.b16 %v1275, %v1264
    %v1529 = vpack.c.b16 %v1276, %v1265
    %v1530 = vpack.c.b16 %v1277, %v1266
    %v1531 = vpack.c.b16 %v1278, %v1267
    %v1532 = vpack.c.b16 %v1279, %v1268
    %v1533 = vpack.c.b16 %v1280, %v1269
    %v1534 = vpack.c.b16 %v1292, %v1281
    %v1535 = vpack.c.b16 %v1293, %v1282
    %v1536 = vpack.c.b16 %v1294, %v1283
    %v1537 = vpack.c.b16 %v1295, %v1284
    %v1538 = vpack.c.b16 %v1296, %v1285
    %v1539 = vpack.c.b16 %v1297, %v1286
    %v1540 = vpack.c.b16 %v1298, %v1287
    %v1541 = vpack.c.b16 %v1299, %v1288
    %v1542 = vpack.c.b16 %v1300, %v1289
    %v1543 = vpack.c.b16 %v1301, %v1290
    %v1544 = vpack.c.b16 %v1302, %v1291
    %v1545 = vpack.c.b16 %v1314, %v1303
    %v1546 = vpack.c.b16 %v1315, %v1304
    %v1547 = vpack.c.b16 %v1316, %v1305
    %v1548 = vpack.c.b16 %v1317, %v1306
    %v1549 = vpack.c.b16 %v1318, %v1307
    %v1550 = vpack.c.b16 %v1319, %v1308
    %v1551 = vpack.c.b16 %v1320, %v1309
    %v1552 = vpack.c.b16 %v1321, %v1310
    %v1553 = vpack.c.b16 %v1322, %v1311
    %v1554 = vpack.c.b16 %v1323, %v1312
    %v1555 = vpack.c.b16 %v1324, %v1313
    %v1789 = vlaneseq
    %v1790 = vshrl.u32 %v1789, 7
    %v1791 = vsub.s32 0, %v1790
    %v1792 = vrot.slane %v608, %v1791
    %v1793 = vlaneseq
    %v1794 = vshrl.u32 %v1793, 7
    %v1795 = vsub.s32 1, %v1794
    %v1796 = vrot.slane %v608, %v1795
    %v1797 = vlaneseq
    %v1798 = vshrl.u32 %v1797, 7
    %v1799 = vsub.s32 2, %v1798
    %v1800 = vrot.slane %v608, %v1799
    %v1801 = vlaneseq
    %v1802 = vshrl.u32 %v1801, 7
    %v1803 = vsub.s32 3, %v1802
    %v1804 = vrot.slane %v608, %v1803
    %v1805 = vlaneseq
    %v1806 = vshrl.u32 %v1805, 7
    %v1807 = vsub.s32 4, %v1806
    %v1808 = vrot.slane %v608, %v1807
    %v1809 = vlaneseq
    %v1810 = vshrl.u32 %v1809, 7
    %v1811 = vsub.s32 5, %v1810
    %v1812 = vrot.slane %v608, %v1811
    %v1813 = vlaneseq
    %v1814 = vshrl.u32 %v1813, 7
    %v1815 = vsub.s32 6, %v1814
    %v1816 = vrot.slane %v608, %v1815
    %v1817 = vlaneseq
    %v1818 = vshrl.u32 %v1817, 7
    %v1819 = vsub.s32 7, %v1818
    %v1820 = vrot.slane %v608, %v1819
    %v1821 = vlaneseq
    %v1822 = vshrl.u32 %v1821, 7
    %v1823 = vsub.s32 0, %v1822
    %v1824 = vrot.slane %v610, %v1823
    %v1825 = vlaneseq
    %v1826 = vshrl.u32 %v1825, 7
    %v1827 = vsub.s32 1, %v1826
    %v1828 = vrot.slane %v610, %v1827
    %v1829 = vlaneseq
    %v1830 = vshrl.u32 %v1829, 7
    %v1831 = vsub.s32 2, %v1830
    %v1832 = vrot.slane %v610, %v1831
    %vm1844 = vcmask 654336
    %v1846 = vsel %vm1844, %v353, 0
    %1848 = vmatprep.subr.bf16.mxu0 %v1326
    %1849 = vmatpush1.bf16.msra.mxu0 %v1325
    %1850 = vmatprep.subr.bf16.mxu0 %v1337
    %1851 = vmatpush1.bf16.msra.mxu0 %v1336
    %1852 = vmatprep.subr.bf16.mxu0 %v1348
    %1853 = vmatpush1.bf16.msra.mxu0 %v1347
    %1854 = vmatprep.subr.bf16.mxu0 %v1359
    %1855 = vmatpush1.bf16.msra.mxu0 %v1358
    %1856 = vmatprep.subr.bf16.mxu0 %v1370
    %1857 = vmatpush1.bf16.msra.mxu0 %v1369
    %1858 = vmatprep.subr.bf16.mxu0 %v1381
    %1859 = vmatpush1.bf16.msra.mxu0 %v1380
    %1860 = vmatprep.subr.bf16.mxu0 %v1392
    %1861 = vmatpush1.bf16.msra.mxu0 %v1391
    %1862 = vmatprep.subr.bf16.mxu0 %v1403
    %1863 = vmatpush1.bf16.msra.mxu0 %v1402
    %1864 = vmatprep.subr.bf16.mxu0 %v1414
    %1865 = vmatpush1.bf16.msra.mxu0 %v1413
    %1866 = vmatprep.subr.bf16.mxu0 %v1425
    %1867 = vmatpush1.bf16.msra.mxu0 %v1424
    %1868 = vmatprep.subr.bf16.mxu0 %v1436
    %1869 = vmatpush1.bf16.msra.mxu0 %v1435
    %1870 = vmatprep.subr.bf16.mxu0 %v1447
    %1871 = vmatpush1.bf16.msra.mxu0 %v1446
    %1872 = vmatprep.subr.bf16.mxu0 %v1458
    %1873 = vmatpush1.bf16.msra.mxu0 %v1457
    %1874 = vmatprep.subr.bf16.mxu0 %v1469
    %1875 = vmatpush1.bf16.msra.mxu0 %v1468
    %1876 = vmatprep.subr.bf16.mxu0 %v1480
    %1877 = vmatpush1.bf16.msra.mxu0 %v1479
    %1878 = vmatprep.subr.bf16.mxu0 %v1491
    %1879 = vmatpush1.bf16.msra.mxu0 %v1490
    %1880 = vmatprep.mubr.bf16.mxu0 %v352
    %1881 = vmatmul.mubr.bf16.gmra.mrb[0].mxu0 %v351
    %v1882 = vpop.f32.mrb[0].mxu0
    %v1883 = vadd.f32 %v1792, %v1882
    %v1884 = vpop.f32.mrb[0].mxu0
    %v1885 = vadd.f32 %v1796, %v1884
    %v1886 = vpop.f32.mrb[0].mxu0
    %v1887 = vpop.f32.mrb[0].mxu0
    %1888 = vdwg.mxu0
    %1889 = vmatprep.subr.bf16.mxu0 %v1502
    %1890 = vmatpush1.bf16.msra.mxu0 %v1501
    %1891 = vmatprep.subr.bf16.mxu0 %v1513
    %1892 = vmatpush1.bf16.msra.mxu0 %v1512
    %1893 = vmatprep.subr.bf16.mxu0 %v1524
    %1894 = vmatpush1.bf16.msra.mxu0 %v1523
    %1895 = vmatprep.subr.bf16.mxu0 %v1535
    %1896 = vmatpush1.bf16.msra.mxu0 %v1534
    %1897 = vmatprep.subr.bf16.mxu0 %v1546
    %1898 = vmatpush1.bf16.msra.mxu0 %v1545
    %1899 = vmatprep.subr.bf16.mxu0 0
    %1900 = vmatpush1.bf16.msra.mxu0 0
    %1901 = vmatprep.subr.bf16.mxu0 0
    %1902 = vmatpush1.bf16.msra.mxu0 0
    %1903 = vmatprep.subr.bf16.mxu0 0
    %1904 = vmatpush1.bf16.msra.mxu0 0
    %1905 = vmatprep.subr.bf16.mxu0 0
    %1906 = vmatpush1.bf16.msra.mxu0 0
    %1907 = vmatprep.subr.bf16.mxu0 0
    %1908 = vmatpush1.bf16.msra.mxu0 0
    %1909 = vmatprep.subr.bf16.mxu0 0
    %1910 = vmatpush1.bf16.msra.mxu0 0
    %1911 = vmatprep.subr.bf16.mxu0 0
    %1912 = vmatpush1.bf16.msra.mxu0 0
    %1913 = vmatprep.subr.bf16.mxu0 0
    %1914 = vmatpush1.bf16.msra.mxu0 0
    %1915 = vmatprep.subr.bf16.mxu0 0
    %1916 = vmatpush1.bf16.msra.mxu0 0
    %1917 = vmatprep.subr.bf16.mxu0 0
    %1918 = vmatpush1.bf16.msra.mxu0 0
    %1919 = vmatprep.subr.bf16.mxu0 0
    %1920 = vmatpush1.bf16.msra.mxu0 0
    %1921 = vmatprep.mubr.bf16.mxu0 0
    %1922 = vmatmul.mubr.bf16.gmra.mrb[0].mxu0 %v1846
    %v1923 = vpop.f32.mrb[0].mxu0
    %v1924 = vadd.f32 %v1883, %v1923
    %v1925 = vpop.f32.mrb[0].mxu0
    %v1926 = vadd.f32 %v1885, %v1925
    %v1927 = vpop.f32.mrb[0].mxu0
    %v1928 = vpop.f32.mrb[0].mxu0
    %1929 = vdwg.mxu0
    %1930 = vmatprep.subr.bf16.mxu0 %v1328
    %1931 = vmatpush1.bf16.msra.mxu0 %v1327
    %1932 = vmatprep.subr.bf16.mxu0 %v1339
    %1933 = vmatpush1.bf16.msra.mxu0 %v1338
    %1934 = vmatprep.subr.bf16.mxu0 %v1350
    %1935 = vmatpush1.bf16.msra.mxu0 %v1349
    %1936 = vmatprep.subr.bf16.mxu0 %v1361
    %1937 = vmatpush1.bf16.msra.mxu0 %v1360
    %1938 = vmatprep.subr.bf16.mxu0 %v1372
    %1939 = vmatpush1.bf16.msra.mxu0 %v1371
    %1940 = vmatprep.subr.bf16.mxu0 %v1383
    %1941 = vmatpush1.bf16.msra.mxu0 %v1382
    %1942 = vmatprep.subr.bf16.mxu0 %v1394
    %1943 = vmatpush1.bf16.msra.mxu0 %v1393
    %1944 = vmatprep.subr.bf16.mxu0 %v1405
    %1945 = vmatpush1.bf16.msra.mxu0 %v1404
    %1946 = vmatprep.subr.bf16.mxu0 %v1416
    %1947 = vmatpush1.bf16.msra.mxu0 %v1415
    %1948 = vmatprep.subr.bf16.mxu0 %v1427
    %1949 = vmatpush1.bf16.msra.mxu0 %v1426
    %1950 = vmatprep.subr.bf16.mxu0 %v1438
    %1951 = vmatpush1.bf16.msra.mxu0 %v1437
    %1952 = vmatprep.subr.bf16.mxu0 %v1449
    %1953 = vmatpush1.bf16.msra.mxu0 %v1448
    %1954 = vmatprep.subr.bf16.mxu0 %v1460
    %1955 = vmatpush1.bf16.msra.mxu0 %v1459
    %1956 = vmatprep.subr.bf16.mxu0 %v1471
    %1957 = vmatpush1.bf16.msra.mxu0 %v1470
    %1958 = vmatprep.subr.bf16.mxu0 %v1482
    %1959 = vmatpush1.bf16.msra.mxu0 %v1481
    %1960 = vmatprep.subr.bf16.mxu0 %v1493
    %1961 = vmatpush1.bf16.msra.mxu0 %v1492
    %1962 = vmatprep.mubr.bf16.mxu0 %v352
    %1963 = vmatmul.mubr.bf16.gmra.mrb[0].mxu0 %v351
    %v1964 = vpop.f32.mrb[0].mxu0
    %v1965 = vadd.f32 %v1800, %v1964
    %v1966 = vpop.f32.mrb[0].mxu0
    %v1967 = vadd.f32 %v1804, %v1966
    %v1968 = vpop.f32.mrb[0].mxu0
    %v1969 = vpop.f32.mrb[0].mxu0
    %1970 = vdwg.mxu0
    %1971 = vmatprep.subr.bf16.mxu0 %v1504
    %1972 = vmatpush1.bf16.msra.mxu0 %v1503
    %1973 = vmatprep.subr.bf16.mxu0 %v1515
    %1974 = vmatpush1.bf16.msra.mxu0 %v1514
    %1975 = vmatprep.subr.bf16.mxu0 %v1526
    %1976 = vmatpush1.bf16.msra.mxu0 %v1525
    %1977 = vmatprep.subr.bf16.mxu0 %v1537
    %1978 = vmatpush1.bf16.msra.mxu0 %v1536
    %1979 = vmatprep.subr.bf16.mxu0 %v1548
    %1980 = vmatpush1.bf16.msra.mxu0 %v1547
    %1981 = vmatprep.subr.bf16.mxu0 0
    %1982 = vmatpush1.bf16.msra.mxu0 0
    %1983 = vmatprep.subr.bf16.mxu0 0
    %1984 = vmatpush1.bf16.msra.mxu0 0
    %1985 = vmatprep.subr.bf16.mxu0 0
    %1986 = vmatpush1.bf16.msra.mxu0 0
    %1987 = vmatprep.subr.bf16.mxu0 0
    %1988 = vmatpush1.bf16.msra.mxu0 0
    %1989 = vmatprep.subr.bf16.mxu0 0
    %1990 = vmatpush1.bf16.msra.mxu0 0
    %1991 = vmatprep.subr.bf16.mxu0 0
    %1992 = vmatpush1.bf16.msra.mxu0 0
    %1993 = vmatprep.subr.bf16.mxu0 0
    %1994 = vmatpush1.bf16.msra.mxu0 0
    %1995 = vmatprep.subr.bf16.mxu0 0
    %1996 = vmatpush1.bf16.msra.mxu0 0
    %1997 = vmatprep.subr.bf16.mxu0 0
    %1998 = vmatpush1.bf16.msra.mxu0 0
    %1999 = vmatprep.subr.bf16.mxu0 0
    %2000 = vmatpush1.bf16.msra.mxu0 0
    %2001 = vmatprep.subr.bf16.mxu0 0
    %2002 = vmatpush1.bf16.msra.mxu0 0
    %2003 = vmatprep.mubr.bf16.mxu0 0
    %2004 = vmatmul.mubr.bf16.gmra.mrb[0].mxu0 %v1846
    %v2005 = vpop.f32.mrb[0].mxu0
    %v2006 = vadd.f32 %v1965, %v2005
    %v2007 = vpop.f32.mrb[0].mxu0
    %v2008 = vadd.f32 %v1967, %v2007
    %v2009 = vpop.f32.mrb[0].mxu0
    %v2010 = vpop.f32.mrb[0].mxu0
    %2011 = vdwg.mxu0
    %2012 = vmatprep.subr.bf16.mxu0 %v1330
    %2013 = vmatpush1.bf16.msra.mxu0 %v1329
    %2014 = vmatprep.subr.bf16.mxu0 %v1341
    %2015 = vmatpush1.bf16.msra.mxu0 %v1340
    %2016 = vmatprep.subr.bf16.mxu0 %v1352
    %2017 = vmatpush1.bf16.msra.mxu0 %v1351
    %2018 = vmatprep.subr.bf16.mxu0 %v1363
    %2019 = vmatpush1.bf16.msra.mxu0 %v1362
    %2020 = vmatprep.subr.bf16.mxu0 %v1374
    %2021 = vmatpush1.bf16.msra.mxu0 %v1373
    %2022 = vmatprep.subr.bf16.mxu0 %v1385
    %2023 = vmatpush1.bf16.msra.mxu0 %v1384
    %2024 = vmatprep.subr.bf16.mxu0 %v1396
    %2025 = vmatpush1.bf16.msra.mxu0 %v1395
    %2026 = vmatprep.subr.bf16.mxu0 %v1407
    %2027 = vmatpush1.bf16.msra.mxu0 %v1406
    %2028 = vmatprep.subr.bf16.mxu0 %v1418
    %2029 = vmatpush1.bf16.msra.mxu0 %v1417
    %2030 = vmatprep.subr.bf16.mxu0 %v1429
    %2031 = vmatpush1.bf16.msra.mxu0 %v1428
    %2032 = vmatprep.subr.bf16.mxu0 %v1440
    %2033 = vmatpush1.bf16.msra.mxu0 %v1439
    %2034 = vmatprep.subr.bf16.mxu0 %v1451
    %2035 = vmatpush1.bf16.msra.mxu0 %v1450
    %2036 = vmatprep.subr.bf16.mxu0 %v1462
    %2037 = vmatpush1.bf16.msra.mxu0 %v1461
    %2038 = vmatprep.subr.bf16.mxu0 %v1473
    %2039 = vmatpush1.bf16.msra.mxu0 %v1472
    %2040 = vmatprep.subr.bf16.mxu0 %v1484
    %2041 = vmatpush1.bf16.msra.mxu0 %v1483
    %2042 = vmatprep.subr.bf16.mxu0 %v1495
    %2043 = vmatpush1.bf16.msra.mxu0 %v1494
    %2044 = vmatprep.mubr.bf16.mxu0 %v352
    %2045 = vmatmul.mubr.bf16.gmra.mrb[0].mxu0 %v351
    %v2046 = vpop.f32.mrb[0].mxu0
    %v2047 = vadd.f32 %v1808, %v2046
    %v2048 = vpop.f32.mrb[0].mxu0
    %v2049 = vadd.f32 %v1812, %v2048
    %v2050 = vpop.f32.mrb[0].mxu0
    %v2051 = vpop.f32.mrb[0].mxu0
    %2052 = vdwg.mxu0
    %2053 = vmatprep.subr.bf16.mxu0 %v1506
    %2054 = vmatpush1.bf16.msra.mxu0 %v1505
    %2055 = vmatprep.subr.bf16.mxu0 %v1517
    %2056 = vmatpush1.bf16.msra.mxu0 %v1516
    %2057 = vmatprep.subr.bf16.mxu0 %v1528
    %2058 = vmatpush1.bf16.msra.mxu0 %v1527
    %2059 = vmatprep.subr.bf16.mxu0 %v1539
    %2060 = vmatpush1.bf16.msra.mxu0 %v1538
    %2061 = vmatprep.subr.bf16.mxu0 %v1550
    %2062 = vmatpush1.bf16.msra.mxu0 %v1549
    %2063 = vmatprep.subr.bf16.mxu0 0
    %2064 = vmatpush1.bf16.msra.mxu0 0
    %2065 = vmatprep.subr.bf16.mxu0 0
    %2066 = vmatpush1.bf16.msra.mxu0 0
    %2067 = vmatprep.subr.bf16.mxu0 0
    %2068 = vmatpush1.bf16.msra.mxu0 0
    %2069 = vmatprep.subr.bf16.mxu0 0
    %2070 = vmatpush1.bf16.msra.mxu0 0
    %2071 = vmatprep.subr.bf16.mxu0 0
    %2072 = vmatpush1.bf16.msra.mxu0 0
    %2073 = vmatprep.subr.bf16.mxu0 0
    %2074 = vmatpush1.bf16.msra.mxu0 0
    %2075 = vmatprep.subr.bf16.mxu0 0
    %2076 = vmatpush1.bf16.msra.mxu0 0
    %2077 = vmatprep.subr.bf16.mxu0 0
    %2078 = vmatpush1.bf16.msra.mxu0 0
    %2079 = vmatprep.subr.bf16.mxu0 0
    %2080 = vmatpush1.bf16.msra.mxu0 0
    %2081 = vmatprep.subr.bf16.mxu0 0
    %2082 = vmatpush1.bf16.msra.mxu0 0
    %2083 = vmatprep.subr.bf16.mxu0 0
    %2084 = vmatpush1.bf16.msra.mxu0 0
    %2085 = vmatprep.mubr.bf16.mxu0 0
    %2086 = vmatmul.mubr.bf16.gmra.mrb[0].mxu0 %v1846
    %v2087 = vpop.f32.mrb[0].mxu0
    %v2088 = vadd.f32 %v2047, %v2087
    %v2089 = vpop.f32.mrb[0].mxu0
    %v2090 = vadd.f32 %v2049, %v2089
    %v2091 = vpop.f32.mrb[0].mxu0
    %v2092 = vpop.f32.mrb[0].mxu0
    %2093 = vdwg.mxu0
    %2094 = vmatprep.subr.bf16.mxu0 %v1332
    %2095 = vmatpush1.bf16.msra.mxu0 %v1331
    %2096 = vmatprep.subr.bf16.mxu0 %v1343
    %2097 = vmatpush1.bf16.msra.mxu0 %v1342
    %2098 = vmatprep.subr.bf16.mxu0 %v1354
    %2099 = vmatpush1.bf16.msra.mxu0 %v1353
    %2100 = vmatprep.subr.bf16.mxu0 %v1365
    %2101 = vmatpush1.bf16.msra.mxu0 %v1364
    %2102 = vmatprep.subr.bf16.mxu0 %v1376
    %2103 = vmatpush1.bf16.msra.mxu0 %v1375
    %2104 = vmatprep.subr.bf16.mxu0 %v1387
    %2105 = vmatpush1.bf16.msra.mxu0 %v1386
    %2106 = vmatprep.subr.bf16.mxu0 %v1398
    %2107 = vmatpush1.bf16.msra.mxu0 %v1397
    %2108 = vmatprep.subr.bf16.mxu0 %v1409
    %2109 = vmatpush1.bf16.msra.mxu0 %v1408
    %2110 = vmatprep.subr.bf16.mxu0 %v1420
    %2111 = vmatpush1.bf16.msra.mxu0 %v1419
    %2112 = vmatprep.subr.bf16.mxu0 %v1431
    %2113 = vmatpush1.bf16.msra.mxu0 %v1430
    %2114 = vmatprep.subr.bf16.mxu0 %v1442
    %2115 = vmatpush1.bf16.msra.mxu0 %v1441
    %2116 = vmatprep.subr.bf16.mxu0 %v1453
    %2117 = vmatpush1.bf16.msra.mxu0 %v1452
    %2118 = vmatprep.subr.bf16.mxu0 %v1464
    %2119 = vmatpush1.bf16.msra.mxu0 %v1463
    %2120 = vmatprep.subr.bf16.mxu0 %v1475
    %2121 = vmatpush1.bf16.msra.mxu0 %v1474
    %2122 = vmatprep.subr.bf16.mxu0 %v1486
    %2123 = vmatpush1.bf16.msra.mxu0 %v1485
    %2124 = vmatprep.subr.bf16.mxu0 %v1497
    %2125 = vmatpush1.bf16.msra.mxu0 %v1496
    %2126 = vmatprep.mubr.bf16.mxu0 %v352
    %2127 = vmatmul.mubr.bf16.gmra.mrb[0].mxu0 %v351
    %v2128 = vpop.f32.mrb[0].mxu0
    %v2129 = vadd.f32 %v1816, %v2128
    %v2130 = vpop.f32.mrb[0].mxu0
    %v2131 = vadd.f32 %v1820, %v2130
    %v2132 = vpop.f32.mrb[0].mxu0
    %v2133 = vpop.f32.mrb[0].mxu0
    %2134 = vdwg.mxu0
    %2135 = vmatprep.subr.bf16.mxu0 %v1508
    %2136 = vmatpush1.bf16.msra.mxu0 %v1507
    %2137 = vmatprep.subr.bf16.mxu0 %v1519
    %2138 = vmatpush1.bf16.msra.mxu0 %v1518
    %2139 = vmatprep.subr.bf16.mxu0 %v1530
    %2140 = vmatpush1.bf16.msra.mxu0 %v1529
    %2141 = vmatprep.subr.bf16.mxu0 %v1541
    %2142 = vmatpush1.bf16.msra.mxu0 %v1540
    %2143 = vmatprep.subr.bf16.mxu0 %v1552
    %2144 = vmatpush1.bf16.msra.mxu0 %v1551
    %2145 = vmatprep.subr.bf16.mxu0 0
    %2146 = vmatpush1.bf16.msra.mxu0 0
    %2147 = vmatprep.subr.bf16.mxu0 0
    %2148 = vmatpush1.bf16.msra.mxu0 0
    %2149 = vmatprep.subr.bf16.mxu0 0
    %2150 = vmatpush1.bf16.msra.mxu0 0
    %2151 = vmatprep.subr.bf16.mxu0 0
    %2152 = vmatpush1.bf16.msra.mxu0 0
    %2153 = vmatprep.subr.bf16.mxu0 0
    %2154 = vmatpush1.bf16.msra.mxu0 0
    %2155 = vmatprep.subr.bf16.mxu0 0
    %2156 = vmatpush1.bf16.msra.mxu0 0
    %2157 = vmatprep.subr.bf16.mxu0 0
    %2158 = vmatpush1.bf16.msra.mxu0 0
    %2159 = vmatprep.subr.bf16.mxu0 0
    %2160 = vmatpush1.bf16.msra.mxu0 0
    %2161 = vmatprep.subr.bf16.mxu0 0
    %2162 = vmatpush1.bf16.msra.mxu0 0
    %2163 = vmatprep.subr.bf16.mxu0 0
    %2164 = vmatpush1.bf16.msra.mxu0 0
    %2165 = vmatprep.subr.bf16.mxu0 0
    %2166 = vmatpush1.bf16.msra.mxu0 0
    %2167 = vmatprep.mubr.bf16.mxu0 0
    %2168 = vmatmul.mubr.bf16.gmra.mrb[0].mxu0 %v1846
    %v2169 = vpop.f32.mrb[0].mxu0
    %v2170 = vadd.f32 %v2129, %v2169
    %v2171 = vpop.f32.mrb[0].mxu0
    %v2172 = vadd.f32 %v2131, %v2171
    %v2173 = vpop.f32.mrb[0].mxu0
    %v2174 = vpop.f32.mrb[0].mxu0
    %2175 = vdwg.mxu0
    %2176 = vmatprep.subr.bf16.mxu0 %v1334
    %2177 = vmatpush1.bf16.msra.mxu0 %v1333
    %2178 = vmatprep.subr.bf16.mxu0 %v1345
    %2179 = vmatpush1.bf16.msra.mxu0 %v1344
    %2180 = vmatprep.subr.bf16.mxu0 %v1356
    %2181 = vmatpush1.bf16.msra.mxu0 %v1355
    %2182 = vmatprep.subr.bf16.mxu0 %v1367
    %2183 = vmatpush1.bf16.msra.mxu0 %v1366
    %2184 = vmatprep.subr.bf16.mxu0 %v1378
    %2185 = vmatpush1.bf16.msra.mxu0 %v1377
    %2186 = vmatprep.subr.bf16.mxu0 %v1389
    %2187 = vmatpush1.bf16.msra.mxu0 %v1388
    %2188 = vmatprep.subr.bf16.mxu0 %v1400
    %2189 = vmatpush1.bf16.msra.mxu0 %v1399
    %2190 = vmatprep.subr.bf16.mxu0 %v1411
    %2191 = vmatpush1.bf16.msra.mxu0 %v1410
    %2192 = vmatprep.subr.bf16.mxu0 %v1422
    %2193 = vmatpush1.bf16.msra.mxu0 %v1421
    %2194 = vmatprep.subr.bf16.mxu0 %v1433
    %2195 = vmatpush1.bf16.msra.mxu0 %v1432
    %2196 = vmatprep.subr.bf16.mxu0 %v1444
    %2197 = vmatpush1.bf16.msra.mxu0 %v1443
    %2198 = vmatprep.subr.bf16.mxu0 %v1455
    %2199 = vmatpush1.bf16.msra.mxu0 %v1454
    %2200 = vmatprep.subr.bf16.mxu0 %v1466
    %2201 = vmatpush1.bf16.msra.mxu0 %v1465
    %2202 = vmatprep.subr.bf16.mxu0 %v1477
    %2203 = vmatpush1.bf16.msra.mxu0 %v1476
    %2204 = vmatprep.subr.bf16.mxu0 %v1488
    %2205 = vmatpush1.bf16.msra.mxu0 %v1487
    %2206 = vmatprep.subr.bf16.mxu0 %v1499
    %2207 = vmatpush1.bf16.msra.mxu0 %v1498
    %2208 = vmatprep.mubr.bf16.mxu0 %v352
    %2209 = vmatmul.mubr.bf16.gmra.mrb[0].mxu0 %v351
    %v2210 = vpop.f32.mrb[0].mxu0
    %v2211 = vadd.f32 %v1824, %v2210
    %v2212 = vpop.f32.mrb[0].mxu0
    %v2213 = vadd.f32 %v1828, %v2212
    %v2214 = vpop.f32.mrb[0].mxu0
    %v2215 = vpop.f32.mrb[0].mxu0
    %2216 = vdwg.mxu0
    %2217 = vmatprep.subr.bf16.mxu0 %v1510
    %2218 = vmatpush1.bf16.msra.mxu0 %v1509
    %2219 = vmatprep.subr.bf16.mxu0 %v1521
    %2220 = vmatpush1.bf16.msra.mxu0 %v1520
    %2221 = vmatprep.subr.bf16.mxu0 %v1532
    %2222 = vmatpush1.bf16.msra.mxu0 %v1531
    %2223 = vmatprep.subr.bf16.mxu0 %v1543
    %2224 = vmatpush1.bf16.msra.mxu0 %v1542
    %2225 = vmatprep.subr.bf16.mxu0 %v1554
    %2226 = vmatpush1.bf16.msra.mxu0 %v1553
    %2227 = vmatprep.subr.bf16.mxu0 0
    %2228 = vmatpush1.bf16.msra.mxu0 0
    %2229 = vmatprep.subr.bf16.mxu0 0
    %2230 = vmatpush1.bf16.msra.mxu0 0
    %2231 = vmatprep.subr.bf16.mxu0 0
    %2232 = vmatpush1.bf16.msra.mxu0 0
    %2233 = vmatprep.subr.bf16.mxu0 0
    %2234 = vmatpush1.bf16.msra.mxu0 0
    %2235 = vmatprep.subr.bf16.mxu0 0
    %2236 = vmatpush1.bf16.msra.mxu0 0
    %2237 = vmatprep.subr.bf16.mxu0 0
    %2238 = vmatpush1.bf16.msra.mxu0 0
    %2239 = vmatprep.subr.bf16.mxu0 0
    %2240 = vmatpush1.bf16.msra.mxu0 0
    %2241 = vmatprep.subr.bf16.mxu0 0
    %2242 = vmatpush1.bf16.msra.mxu0 0
    %2243 = vmatprep.subr.bf16.mxu0 0
    %2244 = vmatpush1.bf16.msra.mxu0 0
    %2245 = vmatprep.subr.bf16.mxu0 0
    %2246 = vmatpush1.bf16.msra.mxu0 0
    %2247 = vmatprep.subr.bf16.mxu0 0
    %2248 = vmatpush1.bf16.msra.mxu0 0
    %2249 = vmatprep.mubr.bf16.mxu0 0
    %2250 = vmatmul.mubr.bf16.gmra.mrb[0].mxu0 %v1846
    %v2251 = vpop.f32.mrb[0].mxu0
    %v2252 = vadd.f32 %v2211, %v2251
    %v2253 = vpop.f32.mrb[0].mxu0
    %v2254 = vadd.f32 %v2213, %v2253
    %v2255 = vpop.f32.mrb[0].mxu0
    %v2256 = vpop.f32.mrb[0].mxu0
    %2257 = vdwg.mxu0
    %2258 = vmatprep.subr.bf16.mxu0 0
    %2259 = vmatpush1.bf16.msra.mxu0 %v1335
    %2260 = vmatprep.subr.bf16.mxu0 0
    %2261 = vmatpush1.bf16.msra.mxu0 %v1346
    %2262 = vmatprep.subr.bf16.mxu0 0
    %2263 = vmatpush1.bf16.msra.mxu0 %v1357
    %2264 = vmatprep.subr.bf16.mxu0 0
    %2265 = vmatpush1.bf16.msra.mxu0 %v1368
    %2266 = vmatprep.subr.bf16.mxu0 0
    %2267 = vmatpush1.bf16.msra.mxu0 %v1379
    %2268 = vmatprep.subr.bf16.mxu0 0
    %2269 = vmatpush1.bf16.msra.mxu0 %v1390
    %2270 = vmatprep.subr.bf16.mxu0 0
    %2271 = vmatpush1.bf16.msra.mxu0 %v1401
    %2272 = vmatprep.subr.bf16.mxu0 0
    %2273 = vmatpush1.bf16.msra.mxu0 %v1412
    %2274 = vmatprep.subr.bf16.mxu0 0
    %2275 = vmatpush1.bf16.msra.mxu0 %v1423
    %2276 = vmatprep.subr.bf16.mxu0 0
    %2277 = vmatpush1.bf16.msra.mxu0 %v1434
    %2278 = vmatprep.subr.bf16.mxu0 0
    %2279 = vmatpush1.bf16.msra.mxu0 %v1445
    %2280 = vmatprep.subr.bf16.mxu0 0
    %2281 = vmatpush1.bf16.msra.mxu0 %v1456
    %2282 = vmatprep.subr.bf16.mxu0 0
    %2283 = vmatpush1.bf16.msra.mxu0 %v1467
    %2284 = vmatprep.subr.bf16.mxu0 0
    %2285 = vmatpush1.bf16.msra.mxu0 %v1478
    %2286 = vmatprep.subr.bf16.mxu0 0
    %2287 = vmatpush1.bf16.msra.mxu0 %v1489
    %2288 = vmatprep.subr.bf16.mxu0 0
    %2289 = vmatpush1.bf16.msra.mxu0 %v1500
    %2290 = vmatprep.mubr.bf16.mxu0 %v352
    %2291 = vmatmul.mubr.bf16.gmra.mrb[0].mxu0 %v351
    %v2292 = vpop.f32.mrb[0].mxu0
    %v2293 = vadd.f32 %v1832, %v2292
    %v2294 = vpop.f32.mrb[0].mxu0
    %v2295 = vpop.f32.mrb[0].mxu0
    %v2296 = vpop.f32.mrb[0].mxu0
    %2297 = vdwg.mxu0
    %2298 = vmatprep.subr.bf16.mxu0 0
    %2299 = vmatpush1.bf16.msra.mxu0 %v1511
    %2300 = vmatprep.subr.bf16.mxu0 0
    %2301 = vmatpush1.bf16.msra.mxu0 %v1522
    %2302 = vmatprep.subr.bf16.mxu0 0
    %2303 = vmatpush1.bf16.msra.mxu0 %v1533
    %2304 = vmatprep.subr.bf16.mxu0 0
    %2305 = vmatpush1.bf16.msra.mxu0 %v1544
    %2306 = vmatprep.subr.bf16.mxu0 0
    %2307 = vmatpush1.bf16.msra.mxu0 %v1555
    %2308 = vmatprep.subr.bf16.mxu0 0
    %2309 = vmatpush1.bf16.msra.mxu0 0
    %2310 = vmatprep.subr.bf16.mxu0 0
    %2311 = vmatpush1.bf16.msra.mxu0 0
    %2312 = vmatprep.subr.bf16.mxu0 0
    %2313 = vmatpush1.bf16.msra.mxu0 0
    %2314 = vmatprep.subr.bf16.mxu0 0
    %2315 = vmatpush1.bf16.msra.mxu0 0
    %2316 = vmatprep.subr.bf16.mxu0 0
    %2317 = vmatpush1.bf16.msra.mxu0 0
    %2318 = vmatprep.subr.bf16.mxu0 0
    %2319 = vmatpush1.bf16.msra.mxu0 0
    %2320 = vmatprep.subr.bf16.mxu0 0
    %2321 = vmatpush1.bf16.msra.mxu0 0
    %2322 = vmatprep.subr.bf16.mxu0 0
    %2323 = vmatpush1.bf16.msra.mxu0 0
    %2324 = vmatprep.subr.bf16.mxu0 0
    %2325 = vmatpush1.bf16.msra.mxu0 0
    %2326 = vmatprep.subr.bf16.mxu0 0
    %2327 = vmatpush1.bf16.msra.mxu0 0
    %2328 = vmatprep.subr.bf16.mxu0 0
    %2329 = vmatpush1.bf16.msra.mxu0 0
    %2330 = vmatprep.mubr.bf16.mxu0 0
    %2331 = vmatmul.mubr.bf16.gmra.mrb[0].mxu0 %v1846
    %v2332 = vpop.f32.mrb[0].mxu0
    %v2333 = vadd.f32 %v2293, %v2332
    %v2334 = vpop.f32.mrb[0].mxu0
    %v2335 = vpop.f32.mrb[0].mxu0
    %v2336 = vpop.f32.mrb[0].mxu0
    %2337 = vdwg.mxu0
    %v2338 = vmul.f32 %v1924, 0.5
    %v2339 = vmul.f32 %v1926, 0.5
    %v2340 = vmul.f32 %v2006, 0.5
    %v2341 = vmul.f32 %v2008, 0.5
    %v2342 = vmul.f32 %v2088, 0.5
    %v2343 = vmul.f32 %v2090, 0.5
    %v2344 = vmul.f32 %v2170, 0.5
    %v2345 = vmul.f32 %v2172, 0.5
    %v2346 = vmul.f32 %v2252, 0.5
    %v2347 = vmul.f32 %v2254, 0.5
    %v2348 = vmul.f32 %v2333, 0.5
    %v2349 = vmul.f32 %v1924, 0.70710677
    %v2350 = vmul.f32 %v1926, 0.70710677
    %v2351 = vmul.f32 %v2006, 0.70710677
    %v2352 = vmul.f32 %v2008, 0.70710677
    %v2353 = vmul.f32 %v2088, 0.70710677
    %v2354 = vmul.f32 %v2090, 0.70710677
    %v2355 = vmul.f32 %v2170, 0.70710677
    %v2356 = vmul.f32 %v2172, 0.70710677
    %v2357 = vmul.f32 %v2252, 0.70710677
    %v2358 = vmul.f32 %v2254, 0.70710677
    %v2359 = vmul.f32 %v2333, 0.70710677
    %v2360 = verf.f32.pop %v2349
    %v2361 = verf.f32.pop %v2350
    %v2362 = verf.f32.pop %v2351
    %v2363 = verf.f32.pop %v2352
    %v2364 = verf.f32.pop %v2353
    %v2365 = verf.f32.pop %v2354
    %v2366 = verf.f32.pop %v2355
    %v2367 = verf.f32.pop %v2356
    %v2368 = verf.f32.pop %v2357
    %v2369 = verf.f32.pop %v2358
    %v2370 = verf.f32.pop %v2359
    %v2371 = vadd.f32 %v2360, 1.0
    %v2372 = vadd.f32 %v2361, 1.0
    %v2373 = vadd.f32 %v2362, 1.0
    %v2374 = vadd.f32 %v2363, 1.0
    %v2375 = vadd.f32 %v2364, 1.0
    %v2376 = vadd.f32 %v2365, 1.0
    %v2377 = vadd.f32 %v2366, 1.0
    %v2378 = vadd.f32 %v2367, 1.0
    %v2379 = vadd.f32 %v2368, 1.0
    %v2380 = vadd.f32 %v2369, 1.0
    %v2381 = vadd.f32 %v2370, 1.0
    %v2382 = vmul.f32 %v2338, %v2371
    %v2383 = vmul.f32 %v2339, %v2372
    %v2384 = vmul.f32 %v2340, %v2373
    %v2385 = vmul.f32 %v2341, %v2374
    %v2386 = vmul.f32 %v2342, %v2375
    %v2387 = vmul.f32 %v2343, %v2376
    %v2388 = vmul.f32 %v2344, %v2377
    %v2389 = vmul.f32 %v2345, %v2378
    %v2390 = vmul.f32 %v2346, %v2379
    %v2391 = vmul.f32 %v2347, %v2380
    %v2392 = vmul.f32 %v2348, %v2381
    %s2393 = scalar_lea.vmem [#allocation6], 1
    %v2394 = vld [vmem:[%s2393] ss:$8 sm:$0xf]
    %v2395 = vld [vmem:[%s2393] ss:$8 sm:$0xf0]
    %v2396 = vor.u32 %v2394, %v2395
    %s2397 = scalar_lea.vmem [#allocation6], 65
    %v2398 = vld [vmem:[%s2397] ss:$8 sm:$0x7]
    %v2401 = vlaneseq
    %v2402 = vshrl.u32 %v2401, 7
    %v2403 = vsub.s32 0, %v2402
    %v2404 = vrot.slane %v2396, %v2403
    %v2405 = vlaneseq
    %v2406 = vshrl.u32 %v2405, 7
    %v2407 = vsub.s32 1, %v2406
    %v2408 = vrot.slane %v2396, %v2407
    %v2409 = vlaneseq
    %v2410 = vshrl.u32 %v2409, 7
    %v2411 = vsub.s32 2, %v2410
    %v2412 = vrot.slane %v2396, %v2411
    %v2413 = vlaneseq
    %v2414 = vshrl.u32 %v2413, 7
    %v2415 = vsub.s32 3, %v2414
    %v2416 = vrot.slane %v2396, %v2415
    %v2417 = vlaneseq
    %v2418 = vshrl.u32 %v2417, 7
    %v2419 = vsub.s32 4, %v2418
    %v2420 = vrot.slane %v2396, %v2419
    %v2421 = vlaneseq
    %v2422 = vshrl.u32 %v2421, 7
    %v2423 = vsub.s32 5, %v2422
    %v2424 = vrot.slane %v2396, %v2423
    %v2425 = vlaneseq
    %v2426 = vshrl.u32 %v2425, 7
    %v2427 = vsub.s32 6, %v2426
    %v2428 = vrot.slane %v2396, %v2427
    %v2429 = vlaneseq
    %v2430 = vshrl.u32 %v2429, 7
    %v2431 = vsub.s32 7, %v2430
    %v2432 = vrot.slane %v2396, %v2431
    %v2433 = vlaneseq
    %v2434 = vshrl.u32 %v2433, 7
    %v2435 = vsub.s32 0, %v2434
    %v2436 = vrot.slane %v2398, %v2435
    %v2437 = vlaneseq
    %v2438 = vshrl.u32 %v2437, 7
    %v2439 = vsub.s32 1, %v2438
    %v2440 = vrot.slane %v2398, %v2439
    %v2441 = vlaneseq
    %v2442 = vshrl.u32 %v2441, 7
    %v2443 = vsub.s32 2, %v2442
    %v2444 = vrot.slane %v2398, %v2443
    %v2456 = vmul.f32 %v2382, %v2404
    %v2457 = vmul.f32 %v2383, %v2408
    %v2458 = vmul.f32 %v2384, %v2412
    %v2459 = vmul.f32 %v2385, %v2416
    %v2460 = vmul.f32 %v2386, %v2420
    %v2461 = vmul.f32 %v2387, %v2424
    %v2462 = vmul.f32 %v2388, %v2428
    %v2463 = vmul.f32 %v2389, %v2432
    %v2464 = vmul.f32 %v2390, %v2436
    %v2465 = vmul.f32 %v2391, %v2440
    %v2466 = vmul.f32 %v2392, %v2444
    %vm2467 = vcmask 1040384
    %v2468 = vsel %vm2467, %v2456, 0.0
    %v2469 = vsel %vm2467, %v2457, 0.0
    %v2470 = vadd.f32 %v2468, %v2469
    %v2471 = vsel %vm2467, %v2458, 0.0
    %v2472 = vadd.f32 %v2470, %v2471
    %v2473 = vsel %vm2467, %v2459, 0.0
    %v2474 = vadd.f32 %v2472, %v2473
    %v2475 = vsel %vm2467, %v2460, 0.0
    %v2476 = vadd.f32 %v2474, %v2475
    %v2477 = vsel %vm2467, %v2461, 0.0
    %v2478 = vadd.f32 %v2476, %v2477
    %v2479 = vsel %vm2467, %v2462, 0.0
    %v2480 = vadd.f32 %v2478, %v2479
    %v2481 = vsel %vm2467, %v2463, 0.0
    %v2482 = vadd.f32 %v2480, %v2481
    %v2483 = vsel %vm2467, %v2464, 0.0
    %v2484 = vadd.f32 %v2482, %v2483
    %v2485 = vsel %vm2467, %v2465, 0.0
    %v2486 = vadd.f32 %v2484, %v2485
    %vm2487 = vcmask 516096
    %v2488 = vsel %vm2487, %v2466, 0.0
    %v2489 = vadd.f32 %v2486, %v2488
    %2490 = vadd.xlane.f32.xlu0 %v2489
    %v2491 = vpop.xlane.xlu0 %2490
    %s2492 = sld [smem:[#allocation2 + $0x7]]
    %v2493 = vstv %s2492
    %v2494 = vadd.f32 %v2491, %v2493
    %vm2495 = vcmask 0
    %2496 = vst.msk [vmem:[#allocation10] sm:$0x1] %vm2495, %v2494
    // Predicated region
    $region34: #{tpu_custom_call.1} parent=1 // pred_check
      _
    $region35: #{tpu_custom_call.1} parent=1 // pred_check_branch
      %2498 = sbr.rel (0) target = $region37
    $region36: #{tpu_custom_call.1} parent=1 // pred_region
      %s2500 = ssub.s32 16, 16
      %2501 = vsyncadd [#allocation4], %s2500
      %s2503 = sshll.u32 [#allocation10], 4
      %s2504 = int_to_ptr.vmem [resolvable:$true] %s2503
      %2506 = dma.vmem_to_hbm [thread:$0]  %s2504, 16, %s4, [#allocation4]
    $region37: #{tpu_custom_call.1} parent=1 // pred_fallthru
      _
    // Predicated region
    $region38: #{tpu_custom_call.1} parent=1 // pred_check
      _
    $region39: #{tpu_custom_call.1} parent=1 // pred_check_branch
      %2508 = sbr.rel (0) target = $region41
    $region40: #{tpu_custom_call.1} parent=1 // pred_region
      %2509 = dma.done [#allocation4], 16
    $region41: #{tpu_custom_call.1} parent=1 // pred_fallthru
      _
    %2510 = vsyncpa [#allocation3], 1
    %2511 = vsyncpa [#allocation8], 1
    %2512 = vsyncpa [#allocation4], 1
    %2513 = vsyncpa [#allocation5], 1

</llo_original>
